<compile_context>
chip_gen: v6e
topology: v6e:2x2x1
jax: 0.10.0
libtpu: 0.0.40
codegen_flags: <defaults>
</compile_context>

<pallas_src>
import numpy as np
import jax
import jax.numpy as jnp
from jax import lax
from jax.experimental import pallas as pl
from jax.experimental.pallas import tpu as pltpu

# ----- model hyper-parameters (match EmbeddingNeuralNet.__init__ semantics) --
NUM_CHAMPS = 163
NUM_ROLES = 5
CHAMP_EMB = 8                   # championEmbeddingSize
ROLE_EMB = 4                    # roleEmbeddingSize
HIDDEN = [32, 32]               # hiddenNNSize (kernel below assumes exactly 2)
N_SLOTS = 10
SLOT_FEATS = CHAMP_EMB + ROLE_EMB           # 12
IN_FEATS = N_SLOTS * SLOT_FEATS             # 120
H1, H2 = HIDDEN

VC = NUM_CHAMPS + 1             # 164 champion-embedding rows
VR = NUM_ROLES + 1              # 6 role-embedding rows
VC_PAD = 176                    # per-slot champion segment (multiple of 16 -> bf16-tile clean)
VR_PAD = 16                     # per-slot role segment
KC = N_SLOTS * VC_PAD           # 1760 merged champion contraction width
KR = N_SLOTS * VR_PAD           # 160  merged role contraction width

DEFAULT_TILE_B = 2048           # batch tile on the 128-lane axis
VMEM_LIMIT_BYTES = 48 * 1024 * 1024   # fits v7x (64 MiB); raise to ~96 MiB + tile 4-8k on v5e/v6e


def _round_up(x, m):
    return ((x + m - 1) // m) * m


# ------------------------------ Pallas kernel --------------------------------
def fused_embed_mlp_kernel(cids_ref, rids_ref, ctab_ref, rtab_ref,
                           b1_ref, w2t_ref, b2_ref, w3t_ref, b3_ref, o_ref):
    """One batch tile, fully transposed: the batch lives on the lane axis.

    cids_ref: [10, 1, TB] int32 champion ids   rids_ref: [10, 1, TB] int32 role ids
    ctab_ref: [H1, KC] bf16  merged per-slot (champ_tab @ W1_slot).T, zero padded
    rtab_ref: [H1, KR] bf16
    b1_ref  : [H1, 1] f32    w2t_ref: [H2, H1] bf16    b2_ref: [H2, 1] f32
    w3t_ref : [1, H2] bf16   b3_ref : [1, 1] f32
    o_ref   : [1, TB] f32    (lane-dense output block)
    """
    tb = o_ref.shape[1]
    cid = cids_ref[...]                                   # [10, 1, TB]
    rid = rids_ref[...]                                   # [10, 1, TB]

    # ---- Layer 1, fused with the embedding lookup ----------------------------
    # one_hot(id) @ table == table[id]; padded / out-of-range ids contribute 0.
    # Single vectorized compare per id kind, emitted directly in bf16; the
    # reshape to 2-D is layout-free (176 and 16 are multiples of the bf16
    # sublane tile of 16).
    c_iota = lax.broadcasted_iota(jnp.int32, (N_SLOTS, VC_PAD, tb), 1)
    r_iota = lax.broadcasted_iota(jnp.int32, (N_SLOTS, VR_PAD, tb), 1)
    c_oh = (c_iota == cid).astype(jnp.bfloat16).reshape(KC, tb)       # [KC, TB]
    r_oh = (r_iota == rid).astype(jnp.bfloat16).reshape(KR, tb)       # [KR, TB]

    z1 = jnp.dot(ctab_ref[...], c_oh, preferred_element_type=jnp.float32)
    z1 = z1 + jnp.dot(rtab_ref[...], r_oh, preferred_element_type=jnp.float32)
    h1 = jnp.maximum(z1 + b1_ref[...], 0.0)               # [H1, TB] f32, ReLU

    # ---- Layer 2 --------------------------------------------------------------
    h2 = jnp.dot(w2t_ref[...], h1.astype(jnp.bfloat16),
                 preferred_element_type=jnp.float32) + b2_ref[...]
    h2 = jnp.maximum(h2, 0.0)                              # [H2, TB] f32, ReLU

    # ---- Layer 3 + exact sigmoid (only a [1, TB] block; exp rides the EUP) ---
    logit = jnp.dot(w3t_ref[...], h2.astype(jnp.bfloat16),
                    preferred_element_type=jnp.float32) + b3_ref[...]   # [1, TB]
    o_ref[...] = 1.0 / (1.0 + jnp.exp(-logit))


def mlp_pallas(cids, rids, kparams, tile_b):
    """cids/rids: [10, 1, B_pad] int32 with B_pad a multiple of tile_b."""
    ctab, rtab, b1c, w2t, b2c, w3t, b3c = kparams
    b_pad = cids.shape[-1]
    num_tiles = b_pad // tile_b

    flops_per_col = 2 * H1 * (KC + KR) + 2 * H2 * H1 + 2 * H2
    weight_bytes = 2 * (ctab.size + rtab.size + w2t.size + w3t.size) \
                 + 4 * (b1c.size + b2c.size + b3c.size)
    cost = pl.CostEstimate(
        flops=int(b_pad) * int(flops_per_col),
        transcendentals=int(b_pad),
        bytes_accessed=int(4 * (cids.size + rids.size) + 4 * b_pad + weight_bytes),
    )

    return pl.pallas_call(
        fused_embed_mlp_kernel,
        out_shape=jax.ShapeDtypeStruct((1, b_pad), jnp.float32),
        grid_spec=pltpu.PrefetchScalarGridSpec(
            num_scalar_prefetch=0,
            grid=(num_tiles,),
            in_specs=[
                pl.BlockSpec((N_SLOTS, 1, tile_b), lambda i: (0, 0, i)),  # champ ids (streamed)
                pl.BlockSpec((N_SLOTS, 1, tile_b), lambda i: (0, 0, i)),  # role ids  (streamed)
                pl.BlockSpec((H1, KC), lambda i: (0, 0)),                 # weights/tables:
                pl.BlockSpec((H1, KR), lambda i: (0, 0)),                 # VMEM-resident across grid
                pl.BlockSpec((H1, 1), lambda i: (0, 0)),
                pl.BlockSpec((H2, H1), lambda i: (0, 0)),
                pl.BlockSpec((H2, 1), lambda i: (0, 0)),
                pl.BlockSpec((1, H2), lambda i: (0, 0)),
                pl.BlockSpec((1, 1), lambda i: (0, 0)),
            ],
            out_specs=pl.BlockSpec((1, tile_b), lambda i: (0, i)),        # lane-dense output
        ),
        compiler_params=pltpu.CompilerParams(
            dimension_semantics=("parallel",),
            vmem_limit_bytes=VMEM_LIMIT_BYTES,
        ),
        cost_estimate=cost,
    )(cids, rids, ctab, rtab, b1c, w2t, b2c, w3t, b3c)


# ------------------------------ forward wrapper -------------------------------
def embedding_nn_forward(X, kparams, tile_b=DEFAULT_TILE_B, min_grid_steps=2):
    """Forward pass matching EmbeddingNeuralNet.forward(X), X: [B, 20] int32."""
    B = X.shape[0]
    # Prefer >= min_grid_steps grid steps (v7x shards the "parallel" axis across
    # its 2 TensorCores); tiles stay lane-aligned multiples of 128.
    tile_b = min(tile_b, max(128, _round_up(pl.cdiv(B, min_grid_steps), 128)))
    num_tiles = pl.cdiv(B, tile_b)
    b_pad = num_tiles * tile_b

    cids = jnp.transpose(X[:, :N_SLOTS]).astype(jnp.int32)            # [10, B]
    rids = jnp.transpose(X[:, N_SLOTS:]).astype(jnp.int32)            # [10, B]
    if b_pad != B:
        cids = jnp.pad(cids, ((0, 0), (0, b_pad - B)))                # padded ids = 0 (valid row)
        rids = jnp.pad(rids, ((0, 0), (0, b_pad - B)))
    cids = cids.reshape(N_SLOTS, 1, b_pad)                            # broadcast-ready planes
    rids = rids.reshape(N_SLOTS, 1, b_pad)

    out = mlp_pallas(cids, rids, kparams, tile_b)                     # [1, b_pad]
    return out[0, :B].reshape(B, 1)                                   # trivial reshape, no transpose


# ------------------------- parameter init & packing ---------------------------
def xavier_uniform(key, fan_in, fan_out, gain):
    limit = gain * np.sqrt(6.0 / (fan_in + fan_out))
    return jax.random.uniform(key, (fan_in, fan_out), jnp.float32, -limit, limit)


def init_params(key):
    """f32 parameters following the PyTorch module's initialisation scheme."""
    keys = jax.random.split(key, 8)
    gain = np.sqrt(2.0)
    champ_tab = jax.random.normal(keys[0], (VC, CHAMP_EMB), jnp.float32)  # nn.Embedding: N(0,1)
    role_tab = jax.random.normal(keys[1], (VR, ROLE_EMB), jnp.float32)

    sizes = [IN_FEATS] + HIDDEN + [1]
    w1 = xavier_uniform(keys[2], sizes[0], sizes[1], gain)    # stored [in, out]
    w2 = xavier_uniform(keys[3], sizes[1], sizes[2], gain)
    w3 = xavier_uniform(keys[4], sizes[2], sizes[3], gain)

    def bias(k, fan_in, n):                                   # nn.Linear default bias init
        b = 1.0 / np.sqrt(fan_in)
        return jax.random.uniform(k, (n,), jnp.float32, -b, b)

    b1 = bias(keys[5], sizes[0], sizes[1])
    b2 = bias(keys[6], sizes[1], sizes[2])
    b3 = bias(keys[7], sizes[2], sizes[3])
    return dict(champ_tab=champ_tab, role_tab=role_tab,
                w1=w1, b1=b1, w2=w2, b2=b2, w3=w3, b3=b3)


def pack_kernel_params(params):
    """Pre-multiply the embedding tables into per-slot first-layer tables,
    concatenate them along the contraction axis (slot-major), and lay every
    operand out for the transposed (batch-on-lanes) kernel."""
    w1 = params["w1"]                                         # [120, 32]
    c_blocks, r_blocks = [], []
    for s in range(N_SLOTS):
        wc = w1[s * SLOT_FEATS: s * SLOT_FEATS + CHAMP_EMB]           # [8, 32]
        wr = w1[s * SLOT_FEATS + CHAMP_EMB: (s + 1) * SLOT_FEATS]     # [4, 32]
        tc = jnp.pad(params["champ_tab"] @ wc, ((0, VC_PAD - VC), (0, 0)))  # [176, 32]
        tr = jnp.pad(params["role_tab"] @ wr, ((0, VR_PAD - VR), (0, 0)))   # [16, 32]
        c_blocks.append(tc)
        r_blocks.append(tr)
    ctab = jnp.concatenate(c_blocks, axis=0).T.astype(jnp.bfloat16)   # [32, KC=1760]
    rtab = jnp.concatenate(r_blocks, axis=0).T.astype(jnp.bfloat16)   # [32, KR=160]
    b1c = params["b1"].reshape(H1, 1).astype(jnp.float32)
    w2t = jnp.transpose(params["w2"]).astype(jnp.bfloat16)            # [32, 32]
    b2c = params["b2"].reshape(H2, 1).astype(jnp.float32)
    w3t = jnp.transpose(params["w3"]).astype(jnp.bfloat16)            # [1, 32]
    b3c = params["b3"].reshape(1, 1).astype(jnp.float32)
    return ctab, rtab, b1c, w2t, b2c, w3t, b3c


def reference_forward(X, params):
    """Pure-JAX f32 reference of EmbeddingNeuralNet.forward (module semantics)."""
    ce = jnp.take(params["champ_tab"], X[:, :N_SLOTS], axis=0)        # [B, 10, 8]
    re = jnp.take(params["role_tab"], X[:, N_SLOTS:], axis=0)         # [B, 10, 4]
    feats = jnp.concatenate([ce, re], axis=2).reshape(X.shape[0], -1)  # [B, 120]
    h = jnp.maximum(feats @ params["w1"] + params["b1"], 0.0)
    h = jnp.maximum(h @ params["w2"] + params["b2"], 0.0)
    return jax.nn.sigmoid(h @ params["w3"] + params["b3"])            # [B, 1]


# ----------------------------------- main -------------------------------------
if __name__ == "__main__":
    key = jax.random.PRNGKey(0)
    pkey, ckey, rkey = jax.random.split(key, 3)
    params = init_params(pkey)
    kparams = pack_kernel_params(params)

    # Small demo shapes: B deliberately not a multiple of 128 to exercise the
    # padding path; the >=2-grid-steps rule picks tile_b=128 -> a 2-step grid.
    B = 200
    champions = jax.random.randint(ckey, (B, N_SLOTS), 0, VC, jnp.int32)
    roles = jax.random.randint(rkey, (B, N_SLOTS), 0, VR, jnp.int32)
    X = jnp.concatenate([champions, roles], axis=1)           # [B, 20] int32

    out = jax.block_until_ready(embedding_nn_forward(X, kparams))
    ref = jax.block_until_ready(reference_forward(X, params))

    assert out.shape == (B, 1) and out.dtype == jnp.float32
    # Tolerance covers the deliberate bf16 MXU operands / pre-multiplied tables.
    np.testing.assert_allclose(np.asarray(out), np.asarray(ref), rtol=0.0, atol=3e-2)
    print("KERNEL_OK")
</pallas_src>

<mosaic_0001>
module attributes {stable_mosaic.version = 11 : i64} {
  func.func @fused_embed_mlp_kernel(%arg0: i32, %arg1: memref<10x1x128xi32, #tpu.memory_space<vmem>>, %arg2: memref<10x1x128xi32, #tpu.memory_space<vmem>>, %arg3: memref<32x1760xbf16, #tpu.memory_space<vmem>>, %arg4: memref<32x160xbf16, #tpu.memory_space<vmem>>, %arg5: memref<32x1xf32, #tpu.memory_space<vmem>>, %arg6: memref<32x32xbf16, #tpu.memory_space<vmem>>, %arg7: memref<32x1xf32, #tpu.memory_space<vmem>>, %arg8: memref<1x32xbf16, #tpu.memory_space<vmem>>, %arg9: memref<1x1xf32, #tpu.memory_space<vmem>>, %arg10: memref<1x128xf32, #tpu.memory_space<vmem>>) attributes {dimension_semantics = [#tpu.dimension_semantics<parallel>], iteration_bounds = array<i64: 2>, scalar_prefetch = 0 : i64, scratch_operands = 0 : i64, tpu.core_type = #tpu.core_type<tc>, window_params = [{transform_indices = @transform_0, window_bounds = array<i64: 10, 1, 128>}, {transform_indices = @transform_1, window_bounds = array<i64: 10, 1, 128>}, {pipeline_mode = #tpu.pipeline_mode<synchronous>, transform_indices = @transform_2, window_bounds = array<i64: 32, 1760>}, {pipeline_mode = #tpu.pipeline_mode<synchronous>, transform_indices = @transform_3, window_bounds = array<i64: 32, 160>}, {pipeline_mode = #tpu.pipeline_mode<synchronous>, transform_indices = @transform_4, window_bounds = array<i64: 32, 1>}, {pipeline_mode = #tpu.pipeline_mode<synchronous>, transform_indices = @transform_5, window_bounds = array<i64: 32, 32>}, {pipeline_mode = #tpu.pipeline_mode<synchronous>, transform_indices = @transform_6, window_bounds = array<i64: 32, 1>}, {pipeline_mode = #tpu.pipeline_mode<synchronous>, transform_indices = @transform_7, window_bounds = array<i64: 1, 32>}, {pipeline_mode = #tpu.pipeline_mode<synchronous>, transform_indices = @transform_8, window_bounds = array<i64: 1, 1>}, {transform_indices = @transform_9, window_bounds = array<i64: 1, 128>}]} {
    %c0 = arith.constant 0 : index
    %c0_0 = arith.constant 0 : index
    %c0_1 = arith.constant 0 : index
    %0 = vector.load %arg1[%c0, %c0_0, %c0_1] : memref<10x1x128xi32, #tpu.memory_space<vmem>>, vector<10x1x128xi32>
    %c0_2 = arith.constant 0 : index
    %c0_3 = arith.constant 0 : index
    %c0_4 = arith.constant 0 : index
    %1 = vector.load %arg2[%c0_2, %c0_3, %c0_4] : memref<10x1x128xi32, #tpu.memory_space<vmem>>, vector<10x1x128xi32>
    %2 = tpu.iota {dimensions = array<i32: 1>} : vector<10x176x128xi32>
    %3 = tpu.iota {dimensions = array<i32: 1>} : vector<10x16x128xi32>
    %4 = vector.broadcast %0 : vector<10x1x128xi32> to vector<10x176x128xi32>
    %5 = arith.cmpi eq, %2, %4 : vector<10x176x128xi32>
    %6 = arith.extui %5 : vector<10x176x128xi1> to vector<10x176x128xi32>
    %7 = arith.sitofp %6 : vector<10x176x128xi32> to vector<10x176x128xf32>
    %8 = arith.truncf %7 : vector<10x176x128xf32> to vector<10x176x128xbf16>
    %9 = vector.shape_cast %8 : vector<10x176x128xbf16> to vector<1760x128xbf16>
    %10 = vector.broadcast %1 : vector<10x1x128xi32> to vector<10x16x128xi32>
    %11 = arith.cmpi eq, %3, %10 : vector<10x16x128xi32>
    %12 = arith.extui %11 : vector<10x16x128xi1> to vector<10x16x128xi32>
    %13 = arith.sitofp %12 : vector<10x16x128xi32> to vector<10x16x128xf32>
    %14 = arith.truncf %13 : vector<10x16x128xf32> to vector<10x16x128xbf16>
    %15 = vector.shape_cast %14 : vector<10x16x128xbf16> to vector<160x128xbf16>
    %c0_5 = arith.constant 0 : index
    %c0_6 = arith.constant 0 : index
    %16 = vector.load %arg3[%c0_5, %c0_6] : memref<32x1760xbf16, #tpu.memory_space<vmem>>, vector<32x1760xbf16>
    %cst = arith.constant dense<0.000000e+00> : vector<32x128xf32>
    %17 = tpu.matmul %16, %9, %cst {dimension_numbers = #tpu.dot_dimension_numbers<[1], [0], [0], [1], [0, 0, 1, 1], [], []>} : vector<32x1760xbf16>, vector<1760x128xbf16>, vector<32x128xf32> -> vector<32x128xf32>
    %c0_7 = arith.constant 0 : index
    %c0_8 = arith.constant 0 : index
    %18 = vector.load %arg4[%c0_7, %c0_8] : memref<32x160xbf16, #tpu.memory_space<vmem>>, vector<32x160xbf16>
    %cst_9 = arith.constant dense<0.000000e+00> : vector<32x128xf32>
    %19 = tpu.matmul %18, %15, %cst_9 {dimension_numbers = #tpu.dot_dimension_numbers<[1], [0], [0], [1], [0, 0, 1, 1], [], []>} : vector<32x160xbf16>, vector<160x128xbf16>, vector<32x128xf32> -> vector<32x128xf32>
    %20 = arith.addf %17, %19 : vector<32x128xf32>
    %c0_10 = arith.constant 0 : index
    %c0_11 = arith.constant 0 : index
    %21 = vector.load %arg5[%c0_10, %c0_11] : memref<32x1xf32, #tpu.memory_space<vmem>>, vector<32x1xf32>
    %22 = vector.broadcast %21 : vector<32x1xf32> to vector<32x128xf32>
    %23 = arith.addf %20, %22 : vector<32x128xf32>
    %cst_12 = arith.constant 0.000000e+00 : f32
    %24 = vector.broadcast %cst_12 : f32 to vector<32x128xf32>
    %25 = arith.maximumf %23, %24 : vector<32x128xf32>
    %c0_13 = arith.constant 0 : index
    %c0_14 = arith.constant 0 : index
    %26 = vector.load %arg6[%c0_13, %c0_14] : memref<32x32xbf16, #tpu.memory_space<vmem>>, vector<32x32xbf16>
    %27 = arith.truncf %25 : vector<32x128xf32> to vector<32x128xbf16>
    %cst_15 = arith.constant dense<0.000000e+00> : vector<32x128xf32>
    %28 = tpu.matmul %26, %27, %cst_15 {dimension_numbers = #tpu.dot_dimension_numbers<[1], [0], [0], [1], [0, 0, 1, 1], [], []>} : vector<32x32xbf16>, vector<32x128xbf16>, vector<32x128xf32> -> vector<32x128xf32>
    %c0_16 = arith.constant 0 : index
    %c0_17 = arith.constant 0 : index
    %29 = vector.load %arg7[%c0_16, %c0_17] : memref<32x1xf32, #tpu.memory_space<vmem>>, vector<32x1xf32>
    %30 = vector.broadcast %29 : vector<32x1xf32> to vector<32x128xf32>
    %31 = arith.addf %28, %30 : vector<32x128xf32>
    %cst_18 = arith.constant 0.000000e+00 : f32
    %32 = vector.broadcast %cst_18 : f32 to vector<32x128xf32>
    %33 = arith.maximumf %31, %32 : vector<32x128xf32>
    %c0_19 = arith.constant 0 : index
    %c0_20 = arith.constant 0 : index
    %34 = vector.load %arg8[%c0_19, %c0_20] : memref<1x32xbf16, #tpu.memory_space<vmem>>, vector<1x32xbf16>
    %35 = arith.truncf %33 : vector<32x128xf32> to vector<32x128xbf16>
    %cst_21 = arith.constant dense<0.000000e+00> : vector<1x128xf32>
    %36 = tpu.matmul %34, %35, %cst_21 {dimension_numbers = #tpu.dot_dimension_numbers<[1], [0], [0], [1], [0, 0, 1, 1], [], []>} : vector<1x32xbf16>, vector<32x128xbf16>, vector<1x128xf32> -> vector<1x128xf32>
    %c0_22 = arith.constant 0 : index
    %c0_23 = arith.constant 0 : index
    %37 = vector.load %arg9[%c0_22, %c0_23] : memref<1x1xf32, #tpu.memory_space<vmem>>, vector<1x1xf32>
    %38 = vector.broadcast %37 : vector<1x1xf32> to vector<1x128xf32>
    %39 = arith.addf %36, %38 : vector<1x128xf32>
    %cst_24 = arith.constant 0.000000e+00 : f32
    %40 = vector.broadcast %cst_24 : f32 to vector<1x128xf32>
    %41 = arith.subf %40, %39 : vector<1x128xf32>
    %42 = math.exp %41 : vector<1x128xf32>
    %cst_25 = arith.constant 1.000000e+00 : f32
    %43 = vector.broadcast %cst_25 : f32 to vector<1x128xf32>
    %44 = arith.addf %43, %42 : vector<1x128xf32>
    %cst_26 = arith.constant 1.000000e+00 : f32
    %45 = vector.broadcast %cst_26 : f32 to vector<1x128xf32>
    %46 = arith.divf %45, %44 : vector<1x128xf32>
    %c0_27 = arith.constant 0 : index
    %c0_28 = arith.constant 0 : index
    %47 = vector.load %arg10[%c0_27, %c0_28] : memref<1x128xf32, #tpu.memory_space<vmem>>, vector<1x128xf32>
    tpu.vector_store %arg10[%c0_27, %c0_28], %46 {strides = array<i32>} : memref<1x128xf32, #tpu.memory_space<vmem>>, vector<1x128xf32>,
    return
  }
  func.func @transform_0(%arg0: i32) -> (i32, i32, i32) {
    %c0_i32 = arith.constant 0 : i32
    %c0_i32_0 = arith.constant 0 : i32
    %c0_i32_1 = arith.constant 0 : i32
    return %c0_i32, %c0_i32_0, %arg0 : i32, i32, i32
  }
  func.func @transform_1(%arg0: i32) -> (i32, i32, i32) {
    %c0_i32 = arith.constant 0 : i32
    %c0_i32_0 = arith.constant 0 : i32
    %c0_i32_1 = arith.constant 0 : i32
    return %c0_i32, %c0_i32_0, %arg0 : i32, i32, i32
  }
  func.func @transform_2(%arg0: i32) -> (i32, i32) {
    %c0_i32 = arith.constant 0 : i32
    %c0_i32_0 = arith.constant 0 : i32
    %c0_i32_1 = arith.constant 0 : i32
    return %c0_i32, %c0_i32_0 : i32, i32
  }
  func.func @transform_3(%arg0: i32) -> (i32, i32) {
    %c0_i32 = arith.constant 0 : i32
    %c0_i32_0 = arith.constant 0 : i32
    %c0_i32_1 = arith.constant 0 : i32
    return %c0_i32, %c0_i32_0 : i32, i32
  }
  func.func @transform_4(%arg0: i32) -> (i32, i32) {
    %c0_i32 = arith.constant 0 : i32
    %c0_i32_0 = arith.constant 0 : i32
    %c0_i32_1 = arith.constant 0 : i32
    return %c0_i32, %c0_i32_0 : i32, i32
  }
  func.func @transform_5(%arg0: i32) -> (i32, i32) {
    %c0_i32 = arith.constant 0 : i32
    %c0_i32_0 = arith.constant 0 : i32
    %c0_i32_1 = arith.constant 0 : i32
    return %c0_i32, %c0_i32_0 : i32, i32
  }
  func.func @transform_6(%arg0: i32) -> (i32, i32) {
    %c0_i32 = arith.constant 0 : i32
    %c0_i32_0 = arith.constant 0 : i32
    %c0_i32_1 = arith.constant 0 : i32
    return %c0_i32, %c0_i32_0 : i32, i32
  }
  func.func @transform_7(%arg0: i32) -> (i32, i32) {
    %c0_i32 = arith.constant 0 : i32
    %c0_i32_0 = arith.constant 0 : i32
    %c0_i32_1 = arith.constant 0 : i32
    return %c0_i32, %c0_i32_0 : i32, i32
  }
  func.func @transform_8(%arg0: i32) -> (i32, i32) {
    %c0_i32 = arith.constant 0 : i32
    %c0_i32_0 = arith.constant 0 : i32
    %c0_i32_1 = arith.constant 0 : i32
    return %c0_i32, %c0_i32_0 : i32, i32
  }
  func.func @transform_9(%arg0: i32) -> (i32, i32) {
    %c0_i32 = arith.constant 0 : i32
    %c0_i32_0 = arith.constant 0 : i32
    return %c0_i32, %arg0 : i32, i32
  }
}

</mosaic_0001>

<llo_original>
// kernel: tpu_custom_call.1
$region0: #{tpu_custom_call.1}
  #allocation0 [shape = 'u32[]', space=smem, size = 0x4, offset = 0x4, fixed_abs, tag = 'smem constant byte address 0x4 - core index']
  #allocation1 [shape = 'u32[144,128]{1,0:T(1,128)}', space=vmem, size = 0x12000, scoped, tag = 'internal scratch']
  #allocation2 [shape = 'f32[1,1]{1,0:T(1,128)S(1)}', space=vmem, size = 0x200, scoped, tag = 'scoped memory for tpu_custom_call.1']
  %s0 = inlined_call_operand.vmem [shape: s32[10,1,256], index: 0, kind: input, shape index: {}]
  %s1 = inlined_call_operand.hbm [shape: s32[10,1,256], index: 1, kind: input, shape index: {}]
  %s2 = inlined_call_operand.hbm [shape: bf16[32,1760], index: 2, kind: input, shape index: {}]
  %s3 = inlined_call_operand.vmem [shape: bf16[32,160], index: 3, kind: input, shape index: {}]
  %s4 = inlined_call_operand.vmem [shape: f32[32,1], index: 4, kind: input, shape index: {}]
  %s5 = inlined_call_operand.vmem [shape: bf16[32,32], index: 5, kind: input, shape index: {}]
  %s6 = inlined_call_operand.vmem [shape: f32[32,1], index: 6, kind: input, shape index: {}]
  %s7 = inlined_call_operand.vmem [shape: bf16[1,32], index: 7, kind: input, shape index: {}]
  %s8 = inlined_call_operand.<no memory space> [shape: f32[1,1], index: 8, kind: input, shape index: {}]
  %s9 = inlined_call_operand.hbm [shape: f32[1,256], index: 9, kind: output, shape index: {}]
  %s10 = sld [smem:[#allocation0]]
  $region118: #{tpu_custom_call.1} parent=0
    _
  %s12 = ssub.s32 1, %s10
  %s13 = scalar_select 0, %s12, %s10
  %v14 = vstv %s8
  %15 = vst [vmem:[#allocation2] sm:$0x1] %v14
  $region1: #{tpu_custom_call.1} parent=0
    #allocation3 [shape = 'u8[10240]{0}', space=vmem, size = 0x2800, scoped, tag = 'input window, operand 0']
    #allocation4 [shape = 'u8[10240]{0}', space=vmem, size = 0x2800, scoped, tag = 'input window, operand 1']
    #allocation5 [shape = 's32[2]{0}', space=sflag, size = 0x8, scoped, tag = 'scoped memory for tpu_custom_call.1']
    #allocation6 [shape = 's32[2]{0}', space=sflag, size = 0x8, scoped, tag = 'scoped memory for tpu_custom_call.1']
    #allocation7 [shape = 'u8[114688]{0}', space=vmem, size = 0x1c000, scoped, tag = 'input window, operand 2, single buffered']
    #allocation8 [shape = 's32[1]{0}', space=sflag, size = 0x4, scoped, tag = 'scoped memory for tpu_custom_call.1']
    #allocation9 [shape = 'u8[1024]{0}', space=vmem, size = 0x400, scoped, tag = 'output window, operand 0']
    %16 = vsyncpa [#allocation5], 0
    %s17 = scalar_lea.sflag [#allocation5], 1
    %18 = vsyncpa %s17, 0
    %19 = vsyncpa [#allocation8], 0
    %20 = vsyncpa [#allocation6], 0
    %s21 = scalar_lea.sflag [#allocation6], 1
    %22 = vsyncpa %s21, 0
    loop: start=0, step=1, limit=4
    $region2: #{tpu_custom_call.1} parent=1 // loop_pre_header
      _
    $region3: #{tpu_custom_call.1} parent=1 // loop_header
      %s24 = sphi 0, %s28
      %p25 = scmp.ge.s32.totalorder %s24, 4
      %s34 = sphi 0, %s36
      %s37 = sphi 0, %s34
      %s38 = sphi 0, %s37
      %s54 = sphi 0, %s38
      %s60 = sphi 0, %s62
      %s63 = sphi 0, %s60
      %s64 = sphi 0, %s63
      %s80 = sphi 0, %s64
      %s84 = sphi 0, %s84
      %s86 = sphi 0, %s84
      %s87 = sphi 0, %s86
      %s101 = sphi 0, %s87
      %s105 = sphi 0, %s105
      %s107 = sphi 0, %s105
      %s108 = sphi 0, %s107
      %s122 = sphi 0, %s108
      %s126 = sphi 0, %s126
      %s128 = sphi 0, %s126
      %s129 = sphi 0, %s128
      %s143 = sphi 0, %s129
      %s147 = sphi 0, %s147
      %s149 = sphi 0, %s147
      %s150 = sphi 0, %s149
      %s164 = sphi 0, %s150
      %s168 = sphi 0, %s168
      %s170 = sphi 0, %s168
      %s171 = sphi 0, %s170
      %s185 = sphi 0, %s171
      %s189 = sphi 0, %s189
      %s191 = sphi 0, %s189
      %s192 = sphi 0, %s191
      %s206 = sphi 0, %s192
      %s210 = sphi 0, %s210
      %s212 = sphi 0, %s210
      %s213 = sphi 0, %s212
      %s227 = sphi 0, %s213
      %s233 = sphi 0, %s235
      %s236 = sphi 0, %s233
      %s237 = sphi 0, %s236
      %s253 = sphi 0, %s237
    $region4: #{tpu_custom_call.1} parent=1 // loop_header_branch
      %27 = sbr.rel (%p25) target = $region8
    $region5: #{tpu_custom_call.1} parent=1 // loop_body
      %s29 = ssub.s32 %s24, 1
      %s30 = ssub.s32 %s24, 2
      %s31 = sadd.s32 %s24, 1
      %s32 = ssub.s32 %s24, %s31
      %p33 = scmp.eq.s32.totalorder %s32, 0
      %s35 = sadd.s32 %s34, 1
      %s36 = scalar_select %p33, %s34, %s35
      %p39 = pneg %p33
      %p40 = scmp.eq.s32.totalorder %s24, 1
      %p41 = por %p39, %p40
      %p42 = scmp.ne.s32.totalorder %s34, %s37
      %p43 = scmp.eq.s32.totalorder %s24, 0
      %p44 = por %p42, %p43
      %p45 = scmp.ne.s32.totalorder %s34, %s37
      %p46 = scmp.eq.s32.totalorder %s29, 1
      %p47 = por %p45, %p46
      %p48 = scmp.ne.s32.totalorder %s37, %s38
      %p49 = scmp.eq.s32.totalorder %s29, 0
      %p50 = por %p48, %p49
      %p51 = scmp.ne.s32.totalorder %s37, %s38
      %p52 = scmp.eq.s32.totalorder %s30, 1
      %p53 = por %p51, %p52
      %p55 = scmp.ne.s32.totalorder %s38, %s54
      %p56 = scmp.eq.s32.totalorder %s30, 0
      %p57 = por %p55, %p56
      %s58 = ssub.s32 %s24, %s31
      %p59 = scmp.eq.s32.totalorder %s58, 0
      %s61 = sadd.s32 %s60, 1
      %s62 = scalar_select %p59, %s60, %s61
      %p65 = pneg %p59
      %p66 = scmp.eq.s32.totalorder %s24, 1
      %p67 = por %p65, %p66
      %p68 = scmp.ne.s32.totalorder %s60, %s63
      %p69 = scmp.eq.s32.totalorder %s24, 0
      %p70 = por %p68, %p69
      %p71 = scmp.ne.s32.totalorder %s60, %s63
      %p72 = scmp.eq.s32.totalorder %s29, 1
      %p73 = por %p71, %p72
      %p74 = scmp.ne.s32.totalorder %s63, %s64
      %p75 = scmp.eq.s32.totalorder %s29, 0
      %p76 = por %p74, %p75
      %p77 = scmp.ne.s32.totalorder %s63, %s64
      %p78 = scmp.eq.s32.totalorder %s30, 1
      %p79 = por %p77, %p78
      %p81 = scmp.ne.s32.totalorder %s64, %s80
      %p82 = scmp.eq.s32.totalorder %s30, 0
      %p83 = por %p81, %p82
      %s85 = sadd.s32 %s84, 1
      %p88 = scmp.eq.s32.totalorder %s24, 1
      %p89 = scmp.ne.s32.totalorder %s84, %s86
      %p90 = scmp.eq.s32.totalorder %s24, 0
      %p91 = por %p89, %p90
      %p92 = scmp.ne.s32.totalorder %s84, %s86
      %p93 = scmp.eq.s32.totalorder %s29, 1
      %p94 = por %p92, %p93
      %p95 = scmp.ne.s32.totalorder %s86, %s87
      %p96 = scmp.eq.s32.totalorder %s29, 0
      %p97 = por %p95, %p96
      %p98 = scmp.ne.s32.totalorder %s86, %s87
      %p99 = scmp.eq.s32.totalorder %s30, 1
      %p100 = por %p98, %p99
      %p102 = scmp.ne.s32.totalorder %s87, %s101
      %p103 = scmp.eq.s32.totalorder %s30, 0
      %p104 = por %p102, %p103
      %s106 = sadd.s32 %s105, 1
      %p109 = scmp.eq.s32.totalorder %s24, 1
      %p110 = scmp.ne.s32.totalorder %s105, %s107
      %p111 = scmp.eq.s32.totalorder %s24, 0
      %p112 = por %p110, %p111
      %p113 = scmp.ne.s32.totalorder %s105, %s107
      %p114 = scmp.eq.s32.totalorder %s29, 1
      %p115 = por %p113, %p114
      %p116 = scmp.ne.s32.totalorder %s107, %s108
      %p117 = scmp.eq.s32.totalorder %s29, 0
      %p118 = por %p116, %p117
      %p119 = scmp.ne.s32.totalorder %s107, %s108
      %p120 = scmp.eq.s32.totalorder %s30, 1
      %p121 = por %p119, %p120
      %p123 = scmp.ne.s32.totalorder %s108, %s122
      %p124 = scmp.eq.s32.totalorder %s30, 0
      %p125 = por %p123, %p124
      %s127 = sadd.s32 %s126, 1
      %p130 = scmp.eq.s32.totalorder %s24, 1
      %p131 = scmp.ne.s32.totalorder %s126, %s128
      %p132 = scmp.eq.s32.totalorder %s24, 0
      %p133 = por %p131, %p132
      %p134 = scmp.ne.s32.totalorder %s126, %s128
      %p135 = scmp.eq.s32.totalorder %s29, 1
      %p136 = por %p134, %p135
      %p137 = scmp.ne.s32.totalorder %s128, %s129
      %p138 = scmp.eq.s32.totalorder %s29, 0
      %p139 = por %p137, %p138
      %p140 = scmp.ne.s32.totalorder %s128, %s129
      %p141 = scmp.eq.s32.totalorder %s30, 1
      %p142 = por %p140, %p141
      %p144 = scmp.ne.s32.totalorder %s129, %s143
      %p145 = scmp.eq.s32.totalorder %s30, 0
      %p146 = por %p144, %p145
      %s148 = sadd.s32 %s147, 1
      %p151 = scmp.eq.s32.totalorder %s24, 1
      %p152 = scmp.ne.s32.totalorder %s147, %s149
      %p153 = scmp.eq.s32.totalorder %s24, 0
      %p154 = por %p152, %p153
      %p155 = scmp.ne.s32.totalorder %s147, %s149
      %p156 = scmp.eq.s32.totalorder %s29, 1
      %p157 = por %p155, %p156
      %p158 = scmp.ne.s32.totalorder %s149, %s150
      %p159 = scmp.eq.s32.totalorder %s29, 0
      %p160 = por %p158, %p159
      %p161 = scmp.ne.s32.totalorder %s149, %s150
      %p162 = scmp.eq.s32.totalorder %s30, 1
      %p163 = por %p161, %p162
      %p165 = scmp.ne.s32.totalorder %s150, %s164
      %p166 = scmp.eq.s32.totalorder %s30, 0
      %p167 = por %p165, %p166
      %s169 = sadd.s32 %s168, 1
      %p172 = scmp.eq.s32.totalorder %s24, 1
      %p173 = scmp.ne.s32.totalorder %s168, %s170
      %p174 = scmp.eq.s32.totalorder %s24, 0
      %p175 = por %p173, %p174
      %p176 = scmp.ne.s32.totalorder %s168, %s170
      %p177 = scmp.eq.s32.totalorder %s29, 1
      %p178 = por %p176, %p177
      %p179 = scmp.ne.s32.totalorder %s170, %s171
      %p180 = scmp.eq.s32.totalorder %s29, 0
      %p181 = por %p179, %p180
      %p182 = scmp.ne.s32.totalorder %s170, %s171
      %p183 = scmp.eq.s32.totalorder %s30, 1
      %p184 = por %p182, %p183
      %p186 = scmp.ne.s32.totalorder %s171, %s185
      %p187 = scmp.eq.s32.totalorder %s30, 0
      %p188 = por %p186, %p187
      %s190 = sadd.s32 %s189, 1
      %p193 = scmp.eq.s32.totalorder %s24, 1
      %p194 = scmp.ne.s32.totalorder %s189, %s191
      %p195 = scmp.eq.s32.totalorder %s24, 0
      %p196 = por %p194, %p195
      %p197 = scmp.ne.s32.totalorder %s189, %s191
      %p198 = scmp.eq.s32.totalorder %s29, 1
      %p199 = por %p197, %p198
      %p200 = scmp.ne.s32.totalorder %s191, %s192
      %p201 = scmp.eq.s32.totalorder %s29, 0
      %p202 = por %p200, %p201
      %p203 = scmp.ne.s32.totalorder %s191, %s192
      %p204 = scmp.eq.s32.totalorder %s30, 1
      %p205 = por %p203, %p204
      %p207 = scmp.ne.s32.totalorder %s192, %s206
      %p208 = scmp.eq.s32.totalorder %s30, 0
      %p209 = por %p207, %p208
      %s211 = sadd.s32 %s210, 1
      %p214 = scmp.eq.s32.totalorder %s24, 1
      %p215 = scmp.ne.s32.totalorder %s210, %s212
      %p216 = scmp.eq.s32.totalorder %s24, 0
      %p217 = por %p215, %p216
      %p218 = scmp.ne.s32.totalorder %s210, %s212
      %p219 = scmp.eq.s32.totalorder %s29, 1
      %p220 = por %p218, %p219
      %p221 = scmp.ne.s32.totalorder %s212, %s213
      %p222 = scmp.eq.s32.totalorder %s29, 0
      %p223 = por %p221, %p222
      %p224 = scmp.ne.s32.totalorder %s212, %s213
      %p225 = scmp.eq.s32.totalorder %s30, 1
      %p226 = por %p224, %p225
      %p228 = scmp.ne.s32.totalorder %s213, %s227
      %p229 = scmp.eq.s32.totalorder %s30, 0
      %p230 = por %p228, %p229
      %s231 = ssub.s32 %s24, %s31
      %p232 = scmp.eq.s32.totalorder %s231, 0
      %s234 = sadd.s32 %s233, 1
      %s235 = scalar_select %p232, %s233, %s234
      %p238 = pneg %p232
      %p239 = scmp.eq.s32.totalorder %s24, 1
      %p240 = por %p238, %p239
      %p241 = scmp.ne.s32.totalorder %s233, %s236
      %p242 = scmp.eq.s32.totalorder %s24, 0
      %p243 = por %p241, %p242
      %p244 = scmp.ne.s32.totalorder %s233, %s236
      %p245 = scmp.eq.s32.totalorder %s29, 1
      %p246 = por %p244, %p245
      %p247 = scmp.ne.s32.totalorder %s236, %s237
      %p248 = scmp.eq.s32.totalorder %s29, 0
      %p249 = por %p247, %p248
      %p250 = scmp.ne.s32.totalorder %s236, %s237
      %p251 = scmp.eq.s32.totalorder %s30, 1
      %p252 = por %p250, %p251
      %p254 = scmp.ne.s32.totalorder %s237, %s253
      %p255 = scmp.eq.s32.totalorder %s30, 0
      %p256 = por %p254, %p255
      %p257 = scmp.le.s32.totalorder 1, %s24
      %p258 = scmp.lt.s32.totalorder %s24, 3
      %p259 = pnand %p257, %p258
      %p260 = pneg %p259
      // Predicated region
      $region9: #{tpu_custom_call.1} parent=5 // pred_check
        _
      $region10: #{tpu_custom_call.1} parent=5 // pred_check_branch
        %262 = sbr.rel (%p259) target = $region12
      $region11: #{tpu_custom_call.1} parent=5 // pred_region
        %s263 = ssub.s32 %s24, 1
        // Predicated region
        $region13: #{tpu_custom_call.1} parent=11 // pred_check
          %p264 = pneg %p97
        $region14: #{tpu_custom_call.1} parent=11 // pred_check_branch
          %266 = sbr.rel (%p264) target = $region16
        $region15: #{tpu_custom_call.1} parent=11 // pred_region
          %s268 = ssub.s32 3584, 3584
          %269 = vsyncadd [#allocation8], %s268
          %s270 = sshll.u32 [#allocation7], 4
          %s271 = int_to_ptr.vmem [resolvable:$true] %s270
          %276 = dma.hbm_to_vmem [thread:$0]  %s2, 3584, %s271, [#allocation8], 896, 896, 56
        $region16: #{tpu_custom_call.1} parent=11 // pred_fallthru
          _
        // Predicated region
        $region17: #{tpu_custom_call.1} parent=11 // pred_check
          %p277 = pneg %p118
        $region18: #{tpu_custom_call.1} parent=11 // pred_check_branch
          %279 = sbr.rel (%p277) target = $region20
        $region19: #{tpu_custom_call.1} parent=11 // pred_region
          _
        $region20: #{tpu_custom_call.1} parent=11 // pred_fallthru
          _
        // Predicated region
        $region21: #{tpu_custom_call.1} parent=11 // pred_check
          %p280 = pneg %p139
        $region22: #{tpu_custom_call.1} parent=11 // pred_check_branch
          %282 = sbr.rel (%p280) target = $region24
        $region23: #{tpu_custom_call.1} parent=11 // pred_region
          _
        $region24: #{tpu_custom_call.1} parent=11 // pred_fallthru
          _
        // Predicated region
        $region25: #{tpu_custom_call.1} parent=11 // pred_check
          %p283 = pneg %p160
        $region26: #{tpu_custom_call.1} parent=11 // pred_check_branch
          %285 = sbr.rel (%p283) target = $region28
        $region27: #{tpu_custom_call.1} parent=11 // pred_region
          _
        $region28: #{tpu_custom_call.1} parent=11 // pred_fallthru
          _
        // Predicated region
        $region29: #{tpu_custom_call.1} parent=11 // pred_check
          %p286 = pneg %p181
        $region30: #{tpu_custom_call.1} parent=11 // pred_check_branch
          %288 = sbr.rel (%p286) target = $region32
        $region31: #{tpu_custom_call.1} parent=11 // pred_region
          _
        $region32: #{tpu_custom_call.1} parent=11 // pred_fallthru
          _
        // Predicated region
        $region33: #{tpu_custom_call.1} parent=11 // pred_check
          %p289 = pneg %p202
        $region34: #{tpu_custom_call.1} parent=11 // pred_check_branch
          %291 = sbr.rel (%p289) target = $region36
        $region35: #{tpu_custom_call.1} parent=11 // pred_region
          _
        $region36: #{tpu_custom_call.1} parent=11 // pred_fallthru
          _
        // Predicated region
        $region37: #{tpu_custom_call.1} parent=11 // pred_check
          %p292 = pneg %p223
        $region38: #{tpu_custom_call.1} parent=11 // pred_check_branch
          %294 = sbr.rel (%p292) target = $region40
        $region39: #{tpu_custom_call.1} parent=11 // pred_region
          _
        $region40: #{tpu_custom_call.1} parent=11 // pred_fallthru
          _
      $region12: #{tpu_custom_call.1} parent=5 // pred_fallthru
        _
      %p295 = scmp.lt.s32.totalorder %s24, 2
      // Predicated region
      $region41: #{tpu_custom_call.1} parent=5 // pred_check
        %p296 = pneg %p295
      $region42: #{tpu_custom_call.1} parent=5 // pred_check_branch
        %298 = sbr.rel (%p296) target = $region44
      $region43: #{tpu_custom_call.1} parent=5 // pred_region
        // Predicated region
        $region45: #{tpu_custom_call.1} parent=43 // pred_check
          %p299 = pneg %p44
        $region46: #{tpu_custom_call.1} parent=43 // pred_check_branch
          %301 = sbr.rel (%p299) target = $region48
        $region47: #{tpu_custom_call.1} parent=43 // pred_region
          %s302 = sand.u32 %s34, 1
          %s303 = sand.u32 %s34, 1
          %s304 = smul.addr %s303, 10
          %s305 = scalar_lea.vmem [#allocation3], %s304
          %s306 = scalar_lea.vmem %s0, %s24
          // Predicated region
          $region49: #{tpu_custom_call.1} parent=47 // pred_check
            _
          $region50: #{tpu_custom_call.1} parent=47 // pred_check_branch
            %308 = sbr.rel (0) target = $region52
          $region51: #{tpu_custom_call.1} parent=47 // pred_region
            // Predicated region
            $region53: #{tpu_custom_call.1} parent=51 // pred_check
              _
            $region54: #{tpu_custom_call.1} parent=51 // pred_check_branch
              %310 = sbr.rel target = $region56
            $region55: #{tpu_custom_call.1} parent=51 // pred_region
              // Predicated region
              $region68: #{tpu_custom_call.1} parent=55 // pred_check
                _
              $region69: #{tpu_custom_call.1} parent=55 // pred_check_branch
                %344 = sbr.rel (0) target = $region71
              $region70: #{tpu_custom_call.1} parent=55 // pred_region
                loop: start=0, step=1, limit=1
                $region72: #{tpu_custom_call.1} parent=70 // loop_pre_header
                  _
                $region73: #{tpu_custom_call.1} parent=70 // loop_header
                  %s346 = sphi 0, %s350
                  %p347 = scmp.ge.s32.totalorder %s346, 1
                  %s351 = sphi %s306, %s306
                  %s352 = sphi %s305, %s305
                $region74: #{tpu_custom_call.1} parent=70 // loop_header_branch
                  %349 = sbr.rel (%p347) target = $region78
                $region75: #{tpu_custom_call.1} parent=70 // loop_body
                  _
                $region76: #{tpu_custom_call.1} parent=70 // loop_footer
                  %s350 = sadd.s32 1, %s346
                $region77: #{tpu_custom_call.1} parent=70 // loop_footer_branch
                  %345 = sbr.rel target = $region73
                $region78: #{tpu_custom_call.1} parent=70 // loop_exit
                  _
                %s354 = ssub.s32 2, 1
                loop: start=0, step=1, limit=1
                $region79: #{tpu_custom_call.1} parent=70 // loop_pre_header
                  _
                $region80: #{tpu_custom_call.1} parent=70 // loop_header
                  %s356 = sphi 0, %s360
                  %p357 = scmp.ge.s32.totalorder %s356, 1
                  %s361 = sphi %s306, %s306
                  %s362 = sphi %s305, %s305
                $region81: #{tpu_custom_call.1} parent=70 // loop_header_branch
                  %359 = sbr.rel (%p357) target = $region85
                $region82: #{tpu_custom_call.1} parent=70 // loop_body
                  %v363 = vld [vmem:[%s361] sm:%s354]
                  %364 = vst [vmem:[%s362] sm:%s354] %v363
                  %v365 = vld [vmem:[%s361 + $0x2] sm:%s354]
                  %366 = vst [vmem:[%s362 + $0x1] sm:%s354] %v365
                  %v367 = vld [vmem:[%s361 + $0x4] sm:%s354]
                  %368 = vst [vmem:[%s362 + $0x2] sm:%s354] %v367
                  %v369 = vld [vmem:[%s361 + $0x6] sm:%s354]
                  %370 = vst [vmem:[%s362 + $0x3] sm:%s354] %v369
                  %v371 = vld [vmem:[%s361 + $0x8] sm:%s354]
                  %372 = vst [vmem:[%s362 + $0x4] sm:%s354] %v371
                  %v373 = vld [vmem:[%s361 + $0xa] sm:%s354]
                  %374 = vst [vmem:[%s362 + $0x5] sm:%s354] %v373
                  %v375 = vld [vmem:[%s361 + $0xc] sm:%s354]
                  %376 = vst [vmem:[%s362 + $0x6] sm:%s354] %v375
                  %v377 = vld [vmem:[%s361 + $0xe] sm:%s354]
                  %378 = vst [vmem:[%s362 + $0x7] sm:%s354] %v377
                  %v379 = vld [vmem:[%s361 + $0x10] sm:%s354]
                  %380 = vst [vmem:[%s362 + $0x8] sm:%s354] %v379
                  %v381 = vld [vmem:[%s361 + $0x12] sm:%s354]
                  %382 = vst [vmem:[%s362 + $0x9] sm:%s354] %v381
                $region83: #{tpu_custom_call.1} parent=70 // loop_footer
                  %s360 = sadd.s32 1, %s356
                $region84: #{tpu_custom_call.1} parent=70 // loop_footer_branch
                  %355 = sbr.rel target = $region80
                $region85: #{tpu_custom_call.1} parent=70 // loop_exit
                  _
              $region71: #{tpu_custom_call.1} parent=55 // pred_fallthru
                _
            $region56: #{tpu_custom_call.1} parent=51 // pred_fallthru
              _
            // Predicated region
            $region57: #{tpu_custom_call.1} parent=51 // pred_check
              _
            $region58: #{tpu_custom_call.1} parent=51 // pred_check_branch
              %312 = sbr.rel (0) target = $region60
            $region59: #{tpu_custom_call.1} parent=51 // pred_region
              %s314 = ssub.s32 2, 1
              loop: start=0, step=1, limit=1
              $region61: #{tpu_custom_call.1} parent=59 // loop_pre_header
                _
              $region62: #{tpu_custom_call.1} parent=59 // loop_header
                %s316 = sphi 0, %s320
                %p317 = scmp.ge.s32.totalorder %s316, 1
                %s321 = sphi %s306, %s306
                %s322 = sphi %s305, %s305
              $region63: #{tpu_custom_call.1} parent=59 // loop_header_branch
                %319 = sbr.rel (%p317) target = $region67
              $region64: #{tpu_custom_call.1} parent=59 // loop_body
                %v323 = vld [vmem:[%s321] sm:%s314]
                %324 = vst [vmem:[%s322] sm:%s314] %v323
                %v325 = vld [vmem:[%s321 + $0x2] sm:%s314]
                %326 = vst [vmem:[%s322 + $0x1] sm:%s314] %v325
                %v327 = vld [vmem:[%s321 + $0x4] sm:%s314]
                %328 = vst [vmem:[%s322 + $0x2] sm:%s314] %v327
                %v329 = vld [vmem:[%s321 + $0x6] sm:%s314]
                %330 = vst [vmem:[%s322 + $0x3] sm:%s314] %v329
                %v331 = vld [vmem:[%s321 + $0x8] sm:%s314]
                %332 = vst [vmem:[%s322 + $0x4] sm:%s314] %v331
                %v333 = vld [vmem:[%s321 + $0xa] sm:%s314]
                %334 = vst [vmem:[%s322 + $0x5] sm:%s314] %v333
                %v335 = vld [vmem:[%s321 + $0xc] sm:%s314]
                %336 = vst [vmem:[%s322 + $0x6] sm:%s314] %v335
                %v337 = vld [vmem:[%s321 + $0xe] sm:%s314]
                %338 = vst [vmem:[%s322 + $0x7] sm:%s314] %v337
                %v339 = vld [vmem:[%s321 + $0x10] sm:%s314]
                %340 = vst [vmem:[%s322 + $0x8] sm:%s314] %v339
                %v341 = vld [vmem:[%s321 + $0x12] sm:%s314]
                %342 = vst [vmem:[%s322 + $0x9] sm:%s314] %v341
              $region65: #{tpu_custom_call.1} parent=59 // loop_footer
                %s320 = sadd.s32 1, %s316
              $region66: #{tpu_custom_call.1} parent=59 // loop_footer_branch
                %315 = sbr.rel target = $region62
              $region67: #{tpu_custom_call.1} parent=59 // loop_exit
                _
            $region60: #{tpu_custom_call.1} parent=51 // pred_fallthru
              _
          $region52: #{tpu_custom_call.1} parent=47 // pred_fallthru
            _
          %383 = vnop
        $region48: #{tpu_custom_call.1} parent=43 // pred_fallthru
          _
        // Predicated region
        $region86: #{tpu_custom_call.1} parent=43 // pred_check
          %p384 = pneg %p70
        $region87: #{tpu_custom_call.1} parent=43 // pred_check_branch
          %386 = sbr.rel (%p384) target = $region89
        $region88: #{tpu_custom_call.1} parent=43 // pred_region
          %s387 = sand.u32 %s60, 1
          %s388 = scalar_lea.sflag [#allocation5], %s387
          %s389 = sand.u32 %s60, 1
          %s390 = smul.addr %s389, 10
          %s391 = scalar_lea.vmem [#allocation4], %s390
          %s393 = ssub.s32 160, 160
          %394 = vsyncadd %s388, %s393
          %s395 = smul.addr %s24, 16
          %s396 = scalar_lea.hbm %s1, %s395
          %s397 = sshll.u32 %s391, 4
          %s398 = int_to_ptr.vmem [resolvable:$true] %s397
          %403 = dma.hbm_to_vmem [thread:$0]  %s396, 160, %s398, %s388, 32, 16, 1
        $region89: #{tpu_custom_call.1} parent=43 // pred_fallthru
          _
      $region44: #{tpu_custom_call.1} parent=5 // pred_fallthru
        _
      %p404 = scmp.le.s32.totalorder 1, %s24
      %p405 = scmp.lt.s32.totalorder %s24, 3
      %p406 = pnand %p404, %p405
      %p407 = pneg %p406
      // Predicated region
      $region90: #{tpu_custom_call.1} parent=5 // pred_check
        _
      $region91: #{tpu_custom_call.1} parent=5 // pred_check_branch
        %409 = sbr.rel (%p406) target = $region93
      $region92: #{tpu_custom_call.1} parent=5 // pred_region
        %s410 = ssub.s32 %s24, 1
        %s411 = sand.u32 %s37, 1
        %s412 = sand.u32 %s37, 1
        %s413 = smul.addr %s412, 10
        %s414 = scalar_lea.vmem [#allocation3], %s413
        // Predicated region
        $region94: #{tpu_custom_call.1} parent=92 // pred_check
          %p415 = pneg %p50
        $region95: #{tpu_custom_call.1} parent=92 // pred_check_branch
          %417 = sbr.rel (%p415) target = $region97
        $region96: #{tpu_custom_call.1} parent=92 // pred_region
          _
        $region97: #{tpu_custom_call.1} parent=92 // pred_fallthru
          _
        %s418 = sand.u32 %s63, 1
        %s419 = scalar_lea.sflag [#allocation5], %s418
        %s420 = sand.u32 %s63, 1
        %s421 = smul.addr %s420, 10
        %s422 = scalar_lea.vmem [#allocation4], %s421
        // Predicated region
        $region98: #{tpu_custom_call.1} parent=92 // pred_check
          %p423 = pneg %p76
        $region99: #{tpu_custom_call.1} parent=92 // pred_check_branch
          %425 = sbr.rel (%p423) target = $region101
        $region100: #{tpu_custom_call.1} parent=92 // pred_region
          %426 = dma.done %s419, 160
        $region101: #{tpu_custom_call.1} parent=92 // pred_fallthru
          _
        // Predicated region
        $region102: #{tpu_custom_call.1} parent=92 // pred_check
          %p427 = pneg %p97
        $region103: #{tpu_custom_call.1} parent=92 // pred_check_branch
          %429 = sbr.rel (%p427) target = $region105
        $region104: #{tpu_custom_call.1} parent=92 // pred_region
          %430 = dma.done [#allocation8], 3584
        $region105: #{tpu_custom_call.1} parent=92 // pred_fallthru
          _
        %s431 = sand.u32 %s37, 1
        %s432 = sand.u32 %s37, 1
        %s433 = smul.addr %s432, 10
        %s434 = scalar_lea.vmem [#allocation3], %s433
        %p435 = pneg %p50
        %p436 = pneg %p47
        %s437 = sand.u32 %s63, 1
        %s438 = scalar_lea.sflag [#allocation5], %s437
        %s439 = sand.u32 %s63, 1
        %s440 = smul.addr %s439, 10
        %s441 = scalar_lea.vmem [#allocation4], %s440
        %p442 = pneg %p76
        %p443 = pneg %p73
        %p444 = pneg %p97
        %p445 = pneg %p94
        %p446 = pneg %p118
        %p447 = pneg %p115
        %p448 = pneg %p139
        %p449 = pneg %p136
        %p450 = pneg %p160
        %p451 = pneg %p157
        %p452 = pneg %p181
        %p453 = pneg %p178
        %p454 = pneg %p202
        %p455 = pneg %p199
        %p456 = pneg %p223
        %p457 = pneg %p220
        %p458 = pneg %p249
        %p459 = pneg %p246
        %s460 = sand.u32 %s236, 1
        %s461 = scalar_lea.sflag [#allocation6], %s460
        %s462 = sand.u32 %s236, 1
        %s463 = scalar_lea.vmem [#allocation9], %s462
        %v465 = vld [vmem:[%s414] sm:$0x1]
        %v466 = vld [vmem:[%s414 + $0x1] sm:$0x1]
        %v467 = vld [vmem:[%s414 + $0x2] sm:$0x1]
        %v468 = vld [vmem:[%s414 + $0x3] sm:$0x1]
        %v469 = vld [vmem:[%s414 + $0x4] sm:$0x1]
        %v470 = vld [vmem:[%s414 + $0x5] sm:$0x1]
        %v471 = vld [vmem:[%s414 + $0x6] sm:$0x1]
        %v472 = vld [vmem:[%s414 + $0x7] sm:$0x1]
        %v473 = vld [vmem:[%s414 + $0x8] sm:$0x1]
        %v474 = vld [vmem:[%s414 + $0x9] sm:$0x1]
        %v475 = vld [vmem:[%s422] sm:$0x1]
        %v476 = vld [vmem:[%s422 + $0x1] sm:$0x1]
        %v477 = vld [vmem:[%s422 + $0x2] sm:$0x1]
        %v478 = vld [vmem:[%s422 + $0x3] sm:$0x1]
        %v479 = vld [vmem:[%s422 + $0x4] sm:$0x1]
        %v480 = vld [vmem:[%s422 + $0x5] sm:$0x1]
        %v481 = vld [vmem:[%s422 + $0x6] sm:$0x1]
        %v482 = vld [vmem:[%s422 + $0x7] sm:$0x1]
        %v483 = vld [vmem:[%s422 + $0x8] sm:$0x1]
        %v484 = vld [vmem:[%s422 + $0x9] sm:$0x1]
        %v485 = vlaneseq
        %v486 = vshrl.u32 %v485, 7
        %v487 = vadd.s32 %v486, 8
        %v488 = vadd.s32 %v486, 16
        %v489 = vadd.s32 %v486, 24
        %v490 = vadd.s32 %v486, 32
        %v491 = vadd.s32 %v486, 40
        %v492 = vadd.s32 %v486, 48
        %v493 = vadd.s32 %v486, 56
        %v494 = vadd.s32 %v486, 64
        %v495 = vadd.s32 %v486, 72
        %v496 = vadd.s32 %v486, 80
        %v497 = vadd.s32 %v486, 88
        %v498 = vadd.s32 %v486, 96
        %v499 = vadd.s32 %v486, 104
        %v500 = vadd.s32 %v486, 112
        %v501 = vadd.s32 %v486, 120
        %v502 = vadd.s32 %v486, 128
        %v503 = vadd.s32 %v486, 136
        %v504 = vadd.s32 %v486, 144
        %v505 = vadd.s32 %v486, 152
        %v506 = vadd.s32 %v486, 160
        %v507 = vadd.s32 %v486, 168
        %v508 = vlaneseq
        %v509 = vshrl.u32 %v508, 7
        %v510 = vsub.s32 0, %v509
        %v511 = vrot.slane %v465, %v510
        %v512 = vlaneseq
        %v513 = vshrl.u32 %v512, 7
        %v514 = vsub.s32 0, %v513
        %v515 = vrot.slane %v466, %v514
        %v516 = vlaneseq
        %v517 = vshrl.u32 %v516, 7
        %v518 = vsub.s32 0, %v517
        %v519 = vrot.slane %v467, %v518
        %v520 = vlaneseq
        %v521 = vshrl.u32 %v520, 7
        %v522 = vsub.s32 0, %v521
        %v523 = vrot.slane %v468, %v522
        %v524 = vlaneseq
        %v525 = vshrl.u32 %v524, 7
        %v526 = vsub.s32 0, %v525
        %v527 = vrot.slane %v469, %v526
        %v528 = vlaneseq
        %v529 = vshrl.u32 %v528, 7
        %v530 = vsub.s32 0, %v529
        %v531 = vrot.slane %v470, %v530
        %v532 = vlaneseq
        %v533 = vshrl.u32 %v532, 7
        %v534 = vsub.s32 0, %v533
        %v535 = vrot.slane %v471, %v534
        %v536 = vlaneseq
        %v537 = vshrl.u32 %v536, 7
        %v538 = vsub.s32 0, %v537
        %v539 = vrot.slane %v472, %v538
        %v540 = vlaneseq
        %v541 = vshrl.u32 %v540, 7
        %v542 = vsub.s32 0, %v541
        %v543 = vrot.slane %v473, %v542
        %v544 = vlaneseq
        %v545 = vshrl.u32 %v544, 7
        %v546 = vsub.s32 0, %v545
        %v547 = vrot.slane %v474, %v546
        %vm548 = vcmp.eq.s32.totalorder %v486, %v511
        %vm549 = vcmp.eq.s32.totalorder %v487, %v511
        %vm550 = vcmp.eq.s32.totalorder %v488, %v511
        %vm551 = vcmp.eq.s32.totalorder %v489, %v511
        %vm552 = vcmp.eq.s32.totalorder %v490, %v511
        %vm553 = vcmp.eq.s32.totalorder %v491, %v511
        %vm554 = vcmp.eq.s32.totalorder %v492, %v511
        %vm555 = vcmp.eq.s32.totalorder %v493, %v511
        %vm556 = vcmp.eq.s32.totalorder %v494, %v511
        %vm557 = vcmp.eq.s32.totalorder %v495, %v511
        %vm558 = vcmp.eq.s32.totalorder %v496, %v511
        %vm559 = vcmp.eq.s32.totalorder %v497, %v511
        %vm560 = vcmp.eq.s32.totalorder %v498, %v511
        %vm561 = vcmp.eq.s32.totalorder %v499, %v511
        %vm562 = vcmp.eq.s32.totalorder %v500, %v511
        %vm563 = vcmp.eq.s32.totalorder %v501, %v511
        %vm564 = vcmp.eq.s32.totalorder %v502, %v511
        %vm565 = vcmp.eq.s32.totalorder %v503, %v511
        %vm566 = vcmp.eq.s32.totalorder %v504, %v511
        %vm567 = vcmp.eq.s32.totalorder %v505, %v511
        %vm568 = vcmp.eq.s32.totalorder %v506, %v511
        %vm569 = vcmp.eq.s32.totalorder %v507, %v511
        %vm570 = vcmp.eq.s32.totalorder %v486, %v515
        %vm571 = vcmp.eq.s32.totalorder %v487, %v515
        %vm572 = vcmp.eq.s32.totalorder %v488, %v515
        %vm573 = vcmp.eq.s32.totalorder %v489, %v515
        %vm574 = vcmp.eq.s32.totalorder %v490, %v515
        %vm575 = vcmp.eq.s32.totalorder %v491, %v515
        %vm576 = vcmp.eq.s32.totalorder %v492, %v515
        %vm577 = vcmp.eq.s32.totalorder %v493, %v515
        %vm578 = vcmp.eq.s32.totalorder %v494, %v515
        %vm579 = vcmp.eq.s32.totalorder %v495, %v515
        %vm580 = vcmp.eq.s32.totalorder %v496, %v515
        %vm581 = vcmp.eq.s32.totalorder %v497, %v515
        %vm582 = vcmp.eq.s32.totalorder %v498, %v515
        %vm583 = vcmp.eq.s32.totalorder %v499, %v515
        %vm584 = vcmp.eq.s32.totalorder %v500, %v515
        %vm585 = vcmp.eq.s32.totalorder %v501, %v515
        %vm586 = vcmp.eq.s32.totalorder %v502, %v515
        %vm587 = vcmp.eq.s32.totalorder %v503, %v515
        %vm588 = vcmp.eq.s32.totalorder %v504, %v515
        %vm589 = vcmp.eq.s32.totalorder %v505, %v515
        %vm590 = vcmp.eq.s32.totalorder %v506, %v515
        %vm591 = vcmp.eq.s32.totalorder %v507, %v515
        %vm592 = vcmp.eq.s32.totalorder %v486, %v519
        %vm593 = vcmp.eq.s32.totalorder %v487, %v519
        %vm594 = vcmp.eq.s32.totalorder %v488, %v519
        %vm595 = vcmp.eq.s32.totalorder %v489, %v519
        %vm596 = vcmp.eq.s32.totalorder %v490, %v519
        %vm597 = vcmp.eq.s32.totalorder %v491, %v519
        %vm598 = vcmp.eq.s32.totalorder %v492, %v519
        %vm599 = vcmp.eq.s32.totalorder %v493, %v519
        %vm600 = vcmp.eq.s32.totalorder %v494, %v519
        %vm601 = vcmp.eq.s32.totalorder %v495, %v519
        %vm602 = vcmp.eq.s32.totalorder %v496, %v519
        %vm603 = vcmp.eq.s32.totalorder %v497, %v519
        %vm604 = vcmp.eq.s32.totalorder %v498, %v519
        %vm605 = vcmp.eq.s32.totalorder %v499, %v519
        %vm606 = vcmp.eq.s32.totalorder %v500, %v519
        %vm607 = vcmp.eq.s32.totalorder %v501, %v519
        %vm608 = vcmp.eq.s32.totalorder %v502, %v519
        %vm609 = vcmp.eq.s32.totalorder %v503, %v519
        %vm610 = vcmp.eq.s32.totalorder %v504, %v519
        %vm611 = vcmp.eq.s32.totalorder %v505, %v519
        %vm612 = vcmp.eq.s32.totalorder %v506, %v519
        %vm613 = vcmp.eq.s32.totalorder %v507, %v519
        %vm614 = vcmp.eq.s32.totalorder %v486, %v523
        %vm615 = vcmp.eq.s32.totalorder %v487, %v523
        %vm616 = vcmp.eq.s32.totalorder %v488, %v523
        %vm617 = vcmp.eq.s32.totalorder %v489, %v523
        %vm618 = vcmp.eq.s32.totalorder %v490, %v523
        %vm619 = vcmp.eq.s32.totalorder %v491, %v523
        %vm620 = vcmp.eq.s32.totalorder %v492, %v523
        %vm621 = vcmp.eq.s32.totalorder %v493, %v523
        %vm622 = vcmp.eq.s32.totalorder %v494, %v523
        %vm623 = vcmp.eq.s32.totalorder %v495, %v523
        %vm624 = vcmp.eq.s32.totalorder %v496, %v523
        %vm625 = vcmp.eq.s32.totalorder %v497, %v523
        %vm626 = vcmp.eq.s32.totalorder %v498, %v523
        %vm627 = vcmp.eq.s32.totalorder %v499, %v523
        %vm628 = vcmp.eq.s32.totalorder %v500, %v523
        %vm629 = vcmp.eq.s32.totalorder %v501, %v523
        %vm630 = vcmp.eq.s32.totalorder %v502, %v523
        %vm631 = vcmp.eq.s32.totalorder %v503, %v523
        %vm632 = vcmp.eq.s32.totalorder %v504, %v523
        %vm633 = vcmp.eq.s32.totalorder %v505, %v523
        %vm634 = vcmp.eq.s32.totalorder %v506, %v523
        %vm635 = vcmp.eq.s32.totalorder %v507, %v523
        %vm636 = vcmp.eq.s32.totalorder %v486, %v527
        %vm637 = vcmp.eq.s32.totalorder %v487, %v527
        %vm638 = vcmp.eq.s32.totalorder %v488, %v527
        %vm639 = vcmp.eq.s32.totalorder %v489, %v527
        %vm640 = vcmp.eq.s32.totalorder %v490, %v527
        %vm641 = vcmp.eq.s32.totalorder %v491, %v527
        %vm642 = vcmp.eq.s32.totalorder %v492, %v527
        %vm643 = vcmp.eq.s32.totalorder %v493, %v527
        %vm644 = vcmp.eq.s32.totalorder %v494, %v527
        %vm645 = vcmp.eq.s32.totalorder %v495, %v527
        %vm646 = vcmp.eq.s32.totalorder %v496, %v527
        %vm647 = vcmp.eq.s32.totalorder %v497, %v527
        %vm648 = vcmp.eq.s32.totalorder %v498, %v527
        %vm649 = vcmp.eq.s32.totalorder %v499, %v527
        %vm650 = vcmp.eq.s32.totalorder %v500, %v527
        %vm651 = vcmp.eq.s32.totalorder %v501, %v527
        %vm652 = vcmp.eq.s32.totalorder %v502, %v527
        %vm653 = vcmp.eq.s32.totalorder %v503, %v527
        %vm654 = vcmp.eq.s32.totalorder %v504, %v527
        %vm655 = vcmp.eq.s32.totalorder %v505, %v527
        %vm656 = vcmp.eq.s32.totalorder %v506, %v527
        %vm657 = vcmp.eq.s32.totalorder %v507, %v527
        %vm658 = vcmp.eq.s32.totalorder %v486, %v531
        %vm659 = vcmp.eq.s32.totalorder %v487, %v531
        %vm660 = vcmp.eq.s32.totalorder %v488, %v531
        %vm661 = vcmp.eq.s32.totalorder %v489, %v531
        %vm662 = vcmp.eq.s32.totalorder %v490, %v531
        %vm663 = vcmp.eq.s32.totalorder %v491, %v531
        %vm664 = vcmp.eq.s32.totalorder %v492, %v531
        %vm665 = vcmp.eq.s32.totalorder %v493, %v531
        %vm666 = vcmp.eq.s32.totalorder %v494, %v531
        %vm667 = vcmp.eq.s32.totalorder %v495, %v531
        %vm668 = vcmp.eq.s32.totalorder %v496, %v531
        %vm669 = vcmp.eq.s32.totalorder %v497, %v531
        %vm670 = vcmp.eq.s32.totalorder %v498, %v531
        %vm671 = vcmp.eq.s32.totalorder %v499, %v531
        %vm672 = vcmp.eq.s32.totalorder %v500, %v531
        %vm673 = vcmp.eq.s32.totalorder %v501, %v531
        %vm674 = vcmp.eq.s32.totalorder %v502, %v531
        %vm675 = vcmp.eq.s32.totalorder %v503, %v531
        %vm676 = vcmp.eq.s32.totalorder %v504, %v531
        %vm677 = vcmp.eq.s32.totalorder %v505, %v531
        %vm678 = vcmp.eq.s32.totalorder %v506, %v531
        %vm679 = vcmp.eq.s32.totalorder %v507, %v531
        %vm680 = vcmp.eq.s32.totalorder %v486, %v535
        %vm681 = vcmp.eq.s32.totalorder %v487, %v535
        %vm682 = vcmp.eq.s32.totalorder %v488, %v535
        %vm683 = vcmp.eq.s32.totalorder %v489, %v535
        %vm684 = vcmp.eq.s32.totalorder %v490, %v535
        %vm685 = vcmp.eq.s32.totalorder %v491, %v535
        %vm686 = vcmp.eq.s32.totalorder %v492, %v535
        %vm687 = vcmp.eq.s32.totalorder %v493, %v535
        %vm688 = vcmp.eq.s32.totalorder %v494, %v535
        %vm689 = vcmp.eq.s32.totalorder %v495, %v535
        %vm690 = vcmp.eq.s32.totalorder %v496, %v535
        %vm691 = vcmp.eq.s32.totalorder %v497, %v535
        %vm692 = vcmp.eq.s32.totalorder %v498, %v535
        %vm693 = vcmp.eq.s32.totalorder %v499, %v535
        %vm694 = vcmp.eq.s32.totalorder %v500, %v535
        %vm695 = vcmp.eq.s32.totalorder %v501, %v535
        %vm696 = vcmp.eq.s32.totalorder %v502, %v535
        %vm697 = vcmp.eq.s32.totalorder %v503, %v535
        %vm698 = vcmp.eq.s32.totalorder %v504, %v535
        %vm699 = vcmp.eq.s32.totalorder %v505, %v535
        %vm700 = vcmp.eq.s32.totalorder %v506, %v535
        %vm701 = vcmp.eq.s32.totalorder %v507, %v535
        %vm702 = vcmp.eq.s32.totalorder %v486, %v539
        %vm703 = vcmp.eq.s32.totalorder %v487, %v539
        %vm704 = vcmp.eq.s32.totalorder %v488, %v539
        %vm705 = vcmp.eq.s32.totalorder %v489, %v539
        %vm706 = vcmp.eq.s32.totalorder %v490, %v539
        %vm707 = vcmp.eq.s32.totalorder %v491, %v539
        %vm708 = vcmp.eq.s32.totalorder %v492, %v539
        %vm709 = vcmp.eq.s32.totalorder %v493, %v539
        %vm710 = vcmp.eq.s32.totalorder %v494, %v539
        %vm711 = vcmp.eq.s32.totalorder %v495, %v539
        %vm712 = vcmp.eq.s32.totalorder %v496, %v539
        %vm713 = vcmp.eq.s32.totalorder %v497, %v539
        %vm714 = vcmp.eq.s32.totalorder %v498, %v539
        %vm715 = vcmp.eq.s32.totalorder %v499, %v539
        %vm716 = vcmp.eq.s32.totalorder %v500, %v539
        %vm717 = vcmp.eq.s32.totalorder %v501, %v539
        %vm718 = vcmp.eq.s32.totalorder %v502, %v539
        %vm719 = vcmp.eq.s32.totalorder %v503, %v539
        %vm720 = vcmp.eq.s32.totalorder %v504, %v539
        %vm721 = vcmp.eq.s32.totalorder %v505, %v539
        %vm722 = vcmp.eq.s32.totalorder %v506, %v539
        %vm723 = vcmp.eq.s32.totalorder %v507, %v539
        %vm724 = vcmp.eq.s32.totalorder %v486, %v543
        %vm725 = vcmp.eq.s32.totalorder %v487, %v543
        %vm726 = vcmp.eq.s32.totalorder %v488, %v543
        %vm727 = vcmp.eq.s32.totalorder %v489, %v543
        %vm728 = vcmp.eq.s32.totalorder %v490, %v543
        %vm729 = vcmp.eq.s32.totalorder %v491, %v543
        %vm730 = vcmp.eq.s32.totalorder %v492, %v543
        %vm731 = vcmp.eq.s32.totalorder %v493, %v543
        %vm732 = vcmp.eq.s32.totalorder %v494, %v543
        %vm733 = vcmp.eq.s32.totalorder %v495, %v543
        %vm734 = vcmp.eq.s32.totalorder %v496, %v543
        %vm735 = vcmp.eq.s32.totalorder %v497, %v543
        %vm736 = vcmp.eq.s32.totalorder %v498, %v543
        %vm737 = vcmp.eq.s32.totalorder %v499, %v543
        %vm738 = vcmp.eq.s32.totalorder %v500, %v543
        %vm739 = vcmp.eq.s32.totalorder %v501, %v543
        %vm740 = vcmp.eq.s32.totalorder %v502, %v543
        %vm741 = vcmp.eq.s32.totalorder %v503, %v543
        %vm742 = vcmp.eq.s32.totalorder %v504, %v543
        %vm743 = vcmp.eq.s32.totalorder %v505, %v543
        %vm744 = vcmp.eq.s32.totalorder %v506, %v543
        %vm745 = vcmp.eq.s32.totalorder %v507, %v543
        %vm746 = vcmp.eq.s32.totalorder %v486, %v547
        %vm747 = vcmp.eq.s32.totalorder %v487, %v547
        %vm748 = vcmp.eq.s32.totalorder %v488, %v547
        %vm749 = vcmp.eq.s32.totalorder %v489, %v547
        %vm750 = vcmp.eq.s32.totalorder %v490, %v547
        %vm751 = vcmp.eq.s32.totalorder %v491, %v547
        %vm752 = vcmp.eq.s32.totalorder %v492, %v547
        %vm753 = vcmp.eq.s32.totalorder %v493, %v547
        %vm754 = vcmp.eq.s32.totalorder %v494, %v547
        %vm755 = vcmp.eq.s32.totalorder %v495, %v547
        %vm756 = vcmp.eq.s32.totalorder %v496, %v547
        %vm757 = vcmp.eq.s32.totalorder %v497, %v547
        %vm758 = vcmp.eq.s32.totalorder %v498, %v547
        %vm759 = vcmp.eq.s32.totalorder %v499, %v547
        %vm760 = vcmp.eq.s32.totalorder %v500, %v547
        %vm761 = vcmp.eq.s32.totalorder %v501, %v547
        %vm762 = vcmp.eq.s32.totalorder %v502, %v547
        %vm763 = vcmp.eq.s32.totalorder %v503, %v547
        %vm764 = vcmp.eq.s32.totalorder %v504, %v547
        %vm765 = vcmp.eq.s32.totalorder %v505, %v547
        %vm766 = vcmp.eq.s32.totalorder %v506, %v547
        %vm767 = vcmp.eq.s32.totalorder %v507, %v547
        %v768 = vsel %vm548, 1, 0
        %v769 = vsel %vm549, 1, 0
        %v770 = vsel %vm550, 1, 0
        %v771 = vsel %vm551, 1, 0
        %v772 = vsel %vm552, 1, 0
        %v773 = vsel %vm553, 1, 0
        %v774 = vsel %vm554, 1, 0
        %v775 = vsel %vm555, 1, 0
        %v776 = vsel %vm556, 1, 0
        %v777 = vsel %vm557, 1, 0
        %v778 = vsel %vm558, 1, 0
        %v779 = vsel %vm559, 1, 0
        %v780 = vsel %vm560, 1, 0
        %v781 = vsel %vm561, 1, 0
        %v782 = vsel %vm562, 1, 0
        %v783 = vsel %vm563, 1, 0
        %v784 = vsel %vm564, 1, 0
        %v785 = vsel %vm565, 1, 0
        %v786 = vsel %vm566, 1, 0
        %v787 = vsel %vm567, 1, 0
        %v788 = vsel %vm568, 1, 0
        %v789 = vsel %vm569, 1, 0
        %v790 = vsel %vm570, 1, 0
        %v791 = vsel %vm571, 1, 0
        %v792 = vsel %vm572, 1, 0
        %v793 = vsel %vm573, 1, 0
        %v794 = vsel %vm574, 1, 0
        %v795 = vsel %vm575, 1, 0
        %v796 = vsel %vm576, 1, 0
        %v797 = vsel %vm577, 1, 0
        %v798 = vsel %vm578, 1, 0
        %v799 = vsel %vm579, 1, 0
        %v800 = vsel %vm580, 1, 0
        %v801 = vsel %vm581, 1, 0
        %v802 = vsel %vm582, 1, 0
        %v803 = vsel %vm583, 1, 0
        %v804 = vsel %vm584, 1, 0
        %v805 = vsel %vm585, 1, 0
        %v806 = vsel %vm586, 1, 0
        %v807 = vsel %vm587, 1, 0
        %v808 = vsel %vm588, 1, 0
        %v809 = vsel %vm589, 1, 0
        %v810 = vsel %vm590, 1, 0
        %v811 = vsel %vm591, 1, 0
        %v812 = vsel %vm592, 1, 0
        %v813 = vsel %vm593, 1, 0
        %v814 = vsel %vm594, 1, 0
        %v815 = vsel %vm595, 1, 0
        %v816 = vsel %vm596, 1, 0
        %v817 = vsel %vm597, 1, 0
        %v818 = vsel %vm598, 1, 0
        %v819 = vsel %vm599, 1, 0
        %v820 = vsel %vm600, 1, 0
        %v821 = vsel %vm601, 1, 0
        %v822 = vsel %vm602, 1, 0
        %v823 = vsel %vm603, 1, 0
        %v824 = vsel %vm604, 1, 0
        %v825 = vsel %vm605, 1, 0
        %v826 = vsel %vm606, 1, 0
        %v827 = vsel %vm607, 1, 0
        %v828 = vsel %vm608, 1, 0
        %v829 = vsel %vm609, 1, 0
        %v830 = vsel %vm610, 1, 0
        %v831 = vsel %vm611, 1, 0
        %v832 = vsel %vm612, 1, 0
        %v833 = vsel %vm613, 1, 0
        %v834 = vsel %vm614, 1, 0
        %v835 = vsel %vm615, 1, 0
        %v836 = vsel %vm616, 1, 0
        %v837 = vsel %vm617, 1, 0
        %v838 = vsel %vm618, 1, 0
        %v839 = vsel %vm619, 1, 0
        %v840 = vsel %vm620, 1, 0
        %v841 = vsel %vm621, 1, 0
        %v842 = vsel %vm622, 1, 0
        %v843 = vsel %vm623, 1, 0
        %v844 = vsel %vm624, 1, 0
        %v845 = vsel %vm625, 1, 0
        %v846 = vsel %vm626, 1, 0
        %v847 = vsel %vm627, 1, 0
        %v848 = vsel %vm628, 1, 0
        %v849 = vsel %vm629, 1, 0
        %v850 = vsel %vm630, 1, 0
        %v851 = vsel %vm631, 1, 0
        %v852 = vsel %vm632, 1, 0
        %v853 = vsel %vm633, 1, 0
        %v854 = vsel %vm634, 1, 0
        %v855 = vsel %vm635, 1, 0
        %v856 = vsel %vm636, 1, 0
        %v857 = vsel %vm637, 1, 0
        %v858 = vsel %vm638, 1, 0
        %v859 = vsel %vm639, 1, 0
        %v860 = vsel %vm640, 1, 0
        %v861 = vsel %vm641, 1, 0
        %v862 = vsel %vm642, 1, 0
        %v863 = vsel %vm643, 1, 0
        %v864 = vsel %vm644, 1, 0
        %v865 = vsel %vm645, 1, 0
        %v866 = vsel %vm646, 1, 0
        %v867 = vsel %vm647, 1, 0
        %v868 = vsel %vm648, 1, 0
        %v869 = vsel %vm649, 1, 0
        %v870 = vsel %vm650, 1, 0
        %v871 = vsel %vm651, 1, 0
        %v872 = vsel %vm652, 1, 0
        %v873 = vsel %vm653, 1, 0
        %v874 = vsel %vm654, 1, 0
        %v875 = vsel %vm655, 1, 0
        %v876 = vsel %vm656, 1, 0
        %v877 = vsel %vm657, 1, 0
        %v878 = vsel %vm658, 1, 0
        %v879 = vsel %vm659, 1, 0
        %v880 = vsel %vm660, 1, 0
        %v881 = vsel %vm661, 1, 0
        %v882 = vsel %vm662, 1, 0
        %v883 = vsel %vm663, 1, 0
        %v884 = vsel %vm664, 1, 0
        %v885 = vsel %vm665, 1, 0
        %v886 = vsel %vm666, 1, 0
        %v887 = vsel %vm667, 1, 0
        %v888 = vsel %vm668, 1, 0
        %v889 = vsel %vm669, 1, 0
        %v890 = vsel %vm670, 1, 0
        %v891 = vsel %vm671, 1, 0
        %v892 = vsel %vm672, 1, 0
        %v893 = vsel %vm673, 1, 0
        %v894 = vsel %vm674, 1, 0
        %v895 = vsel %vm675, 1, 0
        %v896 = vsel %vm676, 1, 0
        %v897 = vsel %vm677, 1, 0
        %v898 = vsel %vm678, 1, 0
        %v899 = vsel %vm679, 1, 0
        %v900 = vsel %vm680, 1, 0
        %v901 = vsel %vm681, 1, 0
        %v902 = vsel %vm682, 1, 0
        %v903 = vsel %vm683, 1, 0
        %v904 = vsel %vm684, 1, 0
        %v905 = vsel %vm685, 1, 0
        %v906 = vsel %vm686, 1, 0
        %v907 = vsel %vm687, 1, 0
        %v908 = vsel %vm688, 1, 0
        %v909 = vsel %vm689, 1, 0
        %v910 = vsel %vm690, 1, 0
        %v911 = vsel %vm691, 1, 0
        %v912 = vsel %vm692, 1, 0
        %v913 = vsel %vm693, 1, 0
        %v914 = vsel %vm694, 1, 0
        %v915 = vsel %vm695, 1, 0
        %v916 = vsel %vm696, 1, 0
        %v917 = vsel %vm697, 1, 0
        %v918 = vsel %vm698, 1, 0
        %v919 = vsel %vm699, 1, 0
        %v920 = vsel %vm700, 1, 0
        %v921 = vsel %vm701, 1, 0
        %v922 = vsel %vm702, 1, 0
        %v923 = vsel %vm703, 1, 0
        %v924 = vsel %vm704, 1, 0
        %v925 = vsel %vm705, 1, 0
        %v926 = vsel %vm706, 1, 0
        %v927 = vsel %vm707, 1, 0
        %v928 = vsel %vm708, 1, 0
        %v929 = vsel %vm709, 1, 0
        %v930 = vsel %vm710, 1, 0
        %v931 = vsel %vm711, 1, 0
        %v932 = vsel %vm712, 1, 0
        %v933 = vsel %vm713, 1, 0
        %v934 = vsel %vm714, 1, 0
        %v935 = vsel %vm715, 1, 0
        %v936 = vsel %vm716, 1, 0
        %v937 = vsel %vm717, 1, 0
        %v938 = vsel %vm718, 1, 0
        %v939 = vsel %vm719, 1, 0
        %v940 = vsel %vm720, 1, 0
        %v941 = vsel %vm721, 1, 0
        %v942 = vsel %vm722, 1, 0
        %v943 = vsel %vm723, 1, 0
        %v944 = vsel %vm724, 1, 0
        %v945 = vsel %vm725, 1, 0
        %v946 = vsel %vm726, 1, 0
        %v947 = vsel %vm727, 1, 0
        %v948 = vsel %vm728, 1, 0
        %v949 = vsel %vm729, 1, 0
        %v950 = vsel %vm730, 1, 0
        %v951 = vsel %vm731, 1, 0
        %v952 = vsel %vm732, 1, 0
        %v953 = vsel %vm733, 1, 0
        %v954 = vsel %vm734, 1, 0
        %v955 = vsel %vm735, 1, 0
        %v956 = vsel %vm736, 1, 0
        %v957 = vsel %vm737, 1, 0
        %v958 = vsel %vm738, 1, 0
        %v959 = vsel %vm739, 1, 0
        %v960 = vsel %vm740, 1, 0
        %v961 = vsel %vm741, 1, 0
        %v962 = vsel %vm742, 1, 0
        %v963 = vsel %vm743, 1, 0
        %v964 = vsel %vm744, 1, 0
        %v965 = vsel %vm745, 1, 0
        %v966 = vsel %vm746, 1, 0
        %v967 = vsel %vm747, 1, 0
        %v968 = vsel %vm748, 1, 0
        %v969 = vsel %vm749, 1, 0
        %v970 = vsel %vm750, 1, 0
        %v971 = vsel %vm751, 1, 0
        %v972 = vsel %vm752, 1, 0
        %v973 = vsel %vm753, 1, 0
        %v974 = vsel %vm754, 1, 0
        %v975 = vsel %vm755, 1, 0
        %v976 = vsel %vm756, 1, 0
        %v977 = vsel %vm757, 1, 0
        %v978 = vsel %vm758, 1, 0
        %v979 = vsel %vm759, 1, 0
        %v980 = vsel %vm760, 1, 0
        %v981 = vsel %vm761, 1, 0
        %v982 = vsel %vm762, 1, 0
        %v983 = vsel %vm763, 1, 0
        %v984 = vsel %vm764, 1, 0
        %v985 = vsel %vm765, 1, 0
        %v986 = vsel %vm766, 1, 0
        %v987 = vsel %vm767, 1, 0
        %v988 = vcvt.s32.f32 %v768
        %v989 = vcvt.s32.f32 %v769
        %v990 = vcvt.s32.f32 %v770
        %v991 = vcvt.s32.f32 %v771
        %v992 = vcvt.s32.f32 %v772
        %v993 = vcvt.s32.f32 %v773
        %v994 = vcvt.s32.f32 %v774
        %v995 = vcvt.s32.f32 %v775
        %v996 = vcvt.s32.f32 %v776
        %v997 = vcvt.s32.f32 %v777
        %v998 = vcvt.s32.f32 %v778
        %v999 = vcvt.s32.f32 %v779
        %v1000 = vcvt.s32.f32 %v780
        %v1001 = vcvt.s32.f32 %v781
        %v1002 = vcvt.s32.f32 %v782
        %v1003 = vcvt.s32.f32 %v783
        %v1004 = vcvt.s32.f32 %v784
        %v1005 = vcvt.s32.f32 %v785
        %v1006 = vcvt.s32.f32 %v786
        %v1007 = vcvt.s32.f32 %v787
        %v1008 = vcvt.s32.f32 %v788
        %v1009 = vcvt.s32.f32 %v789
        %v1010 = vcvt.s32.f32 %v790
        %v1011 = vcvt.s32.f32 %v791
        %v1012 = vcvt.s32.f32 %v792
        %v1013 = vcvt.s32.f32 %v793
        %v1014 = vcvt.s32.f32 %v794
        %v1015 = vcvt.s32.f32 %v795
        %v1016 = vcvt.s32.f32 %v796
        %v1017 = vcvt.s32.f32 %v797
        %v1018 = vcvt.s32.f32 %v798
        %v1019 = vcvt.s32.f32 %v799
        %v1020 = vcvt.s32.f32 %v800
        %v1021 = vcvt.s32.f32 %v801
        %v1022 = vcvt.s32.f32 %v802
        %v1023 = vcvt.s32.f32 %v803
        %v1024 = vcvt.s32.f32 %v804
        %v1025 = vcvt.s32.f32 %v805
        %v1026 = vcvt.s32.f32 %v806
        %v1027 = vcvt.s32.f32 %v807
        %v1028 = vcvt.s32.f32 %v808
        %v1029 = vcvt.s32.f32 %v809
        %v1030 = vcvt.s32.f32 %v810
        %v1031 = vcvt.s32.f32 %v811
        %v1032 = vcvt.s32.f32 %v812
        %v1033 = vcvt.s32.f32 %v813
        %v1034 = vcvt.s32.f32 %v814
        %v1035 = vcvt.s32.f32 %v815
        %v1036 = vcvt.s32.f32 %v816
        %v1037 = vcvt.s32.f32 %v817
        %v1038 = vcvt.s32.f32 %v818
        %v1039 = vcvt.s32.f32 %v819
        %v1040 = vcvt.s32.f32 %v820
        %v1041 = vcvt.s32.f32 %v821
        %v1042 = vcvt.s32.f32 %v822
        %v1043 = vcvt.s32.f32 %v823
        %v1044 = vcvt.s32.f32 %v824
        %v1045 = vcvt.s32.f32 %v825
        %v1046 = vcvt.s32.f32 %v826
        %v1047 = vcvt.s32.f32 %v827
        %v1048 = vcvt.s32.f32 %v828
        %v1049 = vcvt.s32.f32 %v829
        %v1050 = vcvt.s32.f32 %v830
        %v1051 = vcvt.s32.f32 %v831
        %v1052 = vcvt.s32.f32 %v832
        %v1053 = vcvt.s32.f32 %v833
        %v1054 = vcvt.s32.f32 %v834
        %v1055 = vcvt.s32.f32 %v835
        %v1056 = vcvt.s32.f32 %v836
        %v1057 = vcvt.s32.f32 %v837
        %v1058 = vcvt.s32.f32 %v838
        %v1059 = vcvt.s32.f32 %v839
        %v1060 = vcvt.s32.f32 %v840
        %v1061 = vcvt.s32.f32 %v841
        %v1062 = vcvt.s32.f32 %v842
        %v1063 = vcvt.s32.f32 %v843
        %v1064 = vcvt.s32.f32 %v844
        %v1065 = vcvt.s32.f32 %v845
        %v1066 = vcvt.s32.f32 %v846
        %v1067 = vcvt.s32.f32 %v847
        %v1068 = vcvt.s32.f32 %v848
        %v1069 = vcvt.s32.f32 %v849
        %v1070 = vcvt.s32.f32 %v850
        %v1071 = vcvt.s32.f32 %v851
        %v1072 = vcvt.s32.f32 %v852
        %v1073 = vcvt.s32.f32 %v853
        %v1074 = vcvt.s32.f32 %v854
        %v1075 = vcvt.s32.f32 %v855
        %v1076 = vcvt.s32.f32 %v856
        %v1077 = vcvt.s32.f32 %v857
        %v1078 = vcvt.s32.f32 %v858
        %v1079 = vcvt.s32.f32 %v859
        %v1080 = vcvt.s32.f32 %v860
        %v1081 = vcvt.s32.f32 %v861
        %v1082 = vcvt.s32.f32 %v862
        %v1083 = vcvt.s32.f32 %v863
        %v1084 = vcvt.s32.f32 %v864
        %v1085 = vcvt.s32.f32 %v865
        %v1086 = vcvt.s32.f32 %v866
        %v1087 = vcvt.s32.f32 %v867
        %v1088 = vcvt.s32.f32 %v868
        %v1089 = vcvt.s32.f32 %v869
        %v1090 = vcvt.s32.f32 %v870
        %v1091 = vcvt.s32.f32 %v871
        %v1092 = vcvt.s32.f32 %v872
        %v1093 = vcvt.s32.f32 %v873
        %v1094 = vcvt.s32.f32 %v874
        %v1095 = vcvt.s32.f32 %v875
        %v1096 = vcvt.s32.f32 %v876
        %v1097 = vcvt.s32.f32 %v877
        %v1098 = vcvt.s32.f32 %v878
        %v1099 = vcvt.s32.f32 %v879
        %v1100 = vcvt.s32.f32 %v880
        %v1101 = vcvt.s32.f32 %v881
        %v1102 = vcvt.s32.f32 %v882
        %v1103 = vcvt.s32.f32 %v883
        %v1104 = vcvt.s32.f32 %v884
        %v1105 = vcvt.s32.f32 %v885
        %v1106 = vcvt.s32.f32 %v886
        %v1107 = vcvt.s32.f32 %v887
        %v1108 = vcvt.s32.f32 %v888
        %v1109 = vcvt.s32.f32 %v889
        %v1110 = vcvt.s32.f32 %v890
        %v1111 = vcvt.s32.f32 %v891
        %v1112 = vcvt.s32.f32 %v892
        %v1113 = vcvt.s32.f32 %v893
        %v1114 = vcvt.s32.f32 %v894
        %v1115 = vcvt.s32.f32 %v895
        %v1116 = vcvt.s32.f32 %v896
        %v1117 = vcvt.s32.f32 %v897
        %v1118 = vcvt.s32.f32 %v898
        %v1119 = vcvt.s32.f32 %v899
        %v1120 = vcvt.s32.f32 %v900
        %v1121 = vcvt.s32.f32 %v901
        %v1122 = vcvt.s32.f32 %v902
        %v1123 = vcvt.s32.f32 %v903
        %v1124 = vcvt.s32.f32 %v904
        %v1125 = vcvt.s32.f32 %v905
        %v1126 = vcvt.s32.f32 %v906
        %v1127 = vcvt.s32.f32 %v907
        %v1128 = vcvt.s32.f32 %v908
        %v1129 = vcvt.s32.f32 %v909
        %v1130 = vcvt.s32.f32 %v910
        %v1131 = vcvt.s32.f32 %v911
        %v1132 = vcvt.s32.f32 %v912
        %v1133 = vcvt.s32.f32 %v913
        %v1134 = vcvt.s32.f32 %v914
        %v1135 = vcvt.s32.f32 %v915
        %v1136 = vcvt.s32.f32 %v916
        %v1137 = vcvt.s32.f32 %v917
        %v1138 = vcvt.s32.f32 %v918
        %v1139 = vcvt.s32.f32 %v919
        %v1140 = vcvt.s32.f32 %v920
        %v1141 = vcvt.s32.f32 %v921
        %v1142 = vcvt.s32.f32 %v922
        %v1143 = vcvt.s32.f32 %v923
        %v1144 = vcvt.s32.f32 %v924
        %v1145 = vcvt.s32.f32 %v925
        %v1146 = vcvt.s32.f32 %v926
        %v1147 = vcvt.s32.f32 %v927
        %v1148 = vcvt.s32.f32 %v928
        %v1149 = vcvt.s32.f32 %v929
        %v1150 = vcvt.s32.f32 %v930
        %v1151 = vcvt.s32.f32 %v931
        %v1152 = vcvt.s32.f32 %v932
        %v1153 = vcvt.s32.f32 %v933
        %v1154 = vcvt.s32.f32 %v934
        %v1155 = vcvt.s32.f32 %v935
        %v1156 = vcvt.s32.f32 %v936
        %v1157 = vcvt.s32.f32 %v937
        %v1158 = vcvt.s32.f32 %v938
        %v1159 = vcvt.s32.f32 %v939
        %v1160 = vcvt.s32.f32 %v940
        %v1161 = vcvt.s32.f32 %v941
        %v1162 = vcvt.s32.f32 %v942
        %v1163 = vcvt.s32.f32 %v943
        %v1164 = vcvt.s32.f32 %v944
        %v1165 = vcvt.s32.f32 %v945
        %v1166 = vcvt.s32.f32 %v946
        %v1167 = vcvt.s32.f32 %v947
        %v1168 = vcvt.s32.f32 %v948
        %v1169 = vcvt.s32.f32 %v949
        %v1170 = vcvt.s32.f32 %v950
        %v1171 = vcvt.s32.f32 %v951
        %v1172 = vcvt.s32.f32 %v952
        %v1173 = vcvt.s32.f32 %v953
        %v1174 = vcvt.s32.f32 %v954
        %v1175 = vcvt.s32.f32 %v955
        %v1176 = vcvt.s32.f32 %v956
        %v1177 = vcvt.s32.f32 %v957
        %v1178 = vcvt.s32.f32 %v958
        %v1179 = vcvt.s32.f32 %v959
        %v1180 = vcvt.s32.f32 %v960
        %v1181 = vcvt.s32.f32 %v961
        %v1182 = vcvt.s32.f32 %v962
        %v1183 = vcvt.s32.f32 %v963
        %v1184 = vcvt.s32.f32 %v964
        %v1185 = vcvt.s32.f32 %v965
        %v1186 = vcvt.s32.f32 %v966
        %v1187 = vcvt.s32.f32 %v967
        %v1188 = vcvt.s32.f32 %v968
        %v1189 = vcvt.s32.f32 %v969
        %v1190 = vcvt.s32.f32 %v970
        %v1191 = vcvt.s32.f32 %v971
        %v1192 = vcvt.s32.f32 %v972
        %v1193 = vcvt.s32.f32 %v973
        %v1194 = vcvt.s32.f32 %v974
        %v1195 = vcvt.s32.f32 %v975
        %v1196 = vcvt.s32.f32 %v976
        %v1197 = vcvt.s32.f32 %v977
        %v1198 = vcvt.s32.f32 %v978
        %v1199 = vcvt.s32.f32 %v979
        %v1200 = vcvt.s32.f32 %v980
        %v1201 = vcvt.s32.f32 %v981
        %v1202 = vcvt.s32.f32 %v982
        %v1203 = vcvt.s32.f32 %v983
        %v1204 = vcvt.s32.f32 %v984
        %v1205 = vcvt.s32.f32 %v985
        %v1206 = vcvt.s32.f32 %v986
        %v1207 = vcvt.s32.f32 %v987
        %v1208 = vpack.c.bf16 %v989, %v988
        %v1209 = vpack.c.bf16 %v991, %v990
        %v1210 = vpack.c.bf16 %v993, %v992
        %v1211 = vpack.c.bf16 %v995, %v994
        %v1212 = vpack.c.bf16 %v997, %v996
        %v1213 = vpack.c.bf16 %v999, %v998
        %v1214 = vpack.c.bf16 %v1001, %v1000
        %v1215 = vpack.c.bf16 %v1003, %v1002
        %v1216 = vpack.c.bf16 %v1005, %v1004
        %v1217 = vpack.c.bf16 %v1007, %v1006
        %v1218 = vpack.c.bf16 %v1009, %v1008
        %v1219 = vpack.c.bf16 %v1011, %v1010
        %v1220 = vpack.c.bf16 %v1013, %v1012
        %v1221 = vpack.c.bf16 %v1015, %v1014
        %v1222 = vpack.c.bf16 %v1017, %v1016
        %v1223 = vpack.c.bf16 %v1019, %v1018
        %v1224 = vpack.c.bf16 %v1021, %v1020
        %v1225 = vpack.c.bf16 %v1023, %v1022
        %v1226 = vpack.c.bf16 %v1025, %v1024
        %v1227 = vpack.c.bf16 %v1027, %v1026
        %v1228 = vpack.c.bf16 %v1029, %v1028
        %v1229 = vpack.c.bf16 %v1031, %v1030
        %v1230 = vpack.c.bf16 %v1033, %v1032
        %v1231 = vpack.c.bf16 %v1035, %v1034
        %v1232 = vpack.c.bf16 %v1037, %v1036
        %v1233 = vpack.c.bf16 %v1039, %v1038
        %v1234 = vpack.c.bf16 %v1041, %v1040
        %v1235 = vpack.c.bf16 %v1043, %v1042
        %v1236 = vpack.c.bf16 %v1045, %v1044
        %v1237 = vpack.c.bf16 %v1047, %v1046
        %v1238 = vpack.c.bf16 %v1049, %v1048
        %v1239 = vpack.c.bf16 %v1051, %v1050
        %v1240 = vpack.c.bf16 %v1053, %v1052
        %v1241 = vpack.c.bf16 %v1055, %v1054
        %v1242 = vpack.c.bf16 %v1057, %v1056
        %v1243 = vpack.c.bf16 %v1059, %v1058
        %v1244 = vpack.c.bf16 %v1061, %v1060
        %v1245 = vpack.c.bf16 %v1063, %v1062
        %v1246 = vpack.c.bf16 %v1065, %v1064
        %v1247 = vpack.c.bf16 %v1067, %v1066
        %v1248 = vpack.c.bf16 %v1069, %v1068
        %v1249 = vpack.c.bf16 %v1071, %v1070
        %v1250 = vpack.c.bf16 %v1073, %v1072
        %v1251 = vpack.c.bf16 %v1075, %v1074
        %v1252 = vpack.c.bf16 %v1077, %v1076
        %v1253 = vpack.c.bf16 %v1079, %v1078
        %v1254 = vpack.c.bf16 %v1081, %v1080
        %v1255 = vpack.c.bf16 %v1083, %v1082
        %v1256 = vpack.c.bf16 %v1085, %v1084
        %v1257 = vpack.c.bf16 %v1087, %v1086
        %v1258 = vpack.c.bf16 %v1089, %v1088
        %v1259 = vpack.c.bf16 %v1091, %v1090
        %v1260 = vpack.c.bf16 %v1093, %v1092
        %v1261 = vpack.c.bf16 %v1095, %v1094
        %v1262 = vpack.c.bf16 %v1097, %v1096
        %v1263 = vpack.c.bf16 %v1099, %v1098
        %v1264 = vpack.c.bf16 %v1101, %v1100
        %v1265 = vpack.c.bf16 %v1103, %v1102
        %v1266 = vpack.c.bf16 %v1105, %v1104
        %v1267 = vpack.c.bf16 %v1107, %v1106
        %v1268 = vpack.c.bf16 %v1109, %v1108
        %v1269 = vpack.c.bf16 %v1111, %v1110
        %v1270 = vpack.c.bf16 %v1113, %v1112
        %v1271 = vpack.c.bf16 %v1115, %v1114
        %v1272 = vpack.c.bf16 %v1117, %v1116
        %v1273 = vpack.c.bf16 %v1119, %v1118
        %v1274 = vpack.c.bf16 %v1121, %v1120
        %v1275 = vpack.c.bf16 %v1123, %v1122
        %v1276 = vpack.c.bf16 %v1125, %v1124
        %v1277 = vpack.c.bf16 %v1127, %v1126
        %v1278 = vpack.c.bf16 %v1129, %v1128
        %v1279 = vpack.c.bf16 %v1131, %v1130
        %v1280 = vpack.c.bf16 %v1133, %v1132
        %v1281 = vpack.c.bf16 %v1135, %v1134
        %v1282 = vpack.c.bf16 %v1137, %v1136
        %v1283 = vpack.c.bf16 %v1139, %v1138
        %v1284 = vpack.c.bf16 %v1141, %v1140
        %v1285 = vpack.c.bf16 %v1143, %v1142
        %v1286 = vpack.c.bf16 %v1145, %v1144
        %v1287 = vpack.c.bf16 %v1147, %v1146
        %v1288 = vpack.c.bf16 %v1149, %v1148
        %v1289 = vpack.c.bf16 %v1151, %v1150
        %v1290 = vpack.c.bf16 %v1153, %v1152
        %v1291 = vpack.c.bf16 %v1155, %v1154
        %v1292 = vpack.c.bf16 %v1157, %v1156
        %v1293 = vpack.c.bf16 %v1159, %v1158
        %v1294 = vpack.c.bf16 %v1161, %v1160
        %v1295 = vpack.c.bf16 %v1163, %v1162
        %v1296 = vpack.c.bf16 %v1165, %v1164
        %v1297 = vpack.c.bf16 %v1167, %v1166
        %v1298 = vpack.c.bf16 %v1169, %v1168
        %v1299 = vpack.c.bf16 %v1171, %v1170
        %v1300 = vpack.c.bf16 %v1173, %v1172
        %v1301 = vpack.c.bf16 %v1175, %v1174
        %v1302 = vpack.c.bf16 %v1177, %v1176
        %v1303 = vpack.c.bf16 %v1179, %v1178
        %v1304 = vpack.c.bf16 %v1181, %v1180
        %v1305 = vpack.c.bf16 %v1183, %v1182
        %v1306 = vpack.c.bf16 %v1185, %v1184
        %v1307 = vpack.c.bf16 %v1187, %v1186
        %v1308 = vpack.c.bf16 %v1189, %v1188
        %v1309 = vpack.c.bf16 %v1191, %v1190
        %v1310 = vpack.c.bf16 %v1193, %v1192
        %v1311 = vpack.c.bf16 %v1195, %v1194
        %v1312 = vpack.c.bf16 %v1197, %v1196
        %v1313 = vpack.c.bf16 %v1199, %v1198
        %v1314 = vpack.c.bf16 %v1201, %v1200
        %v1315 = vpack.c.bf16 %v1203, %v1202
        %v1316 = vpack.c.bf16 %v1205, %v1204
        %v1317 = vpack.c.bf16 %v1207, %v1206
        %v1318 = vlaneseq
        %v1319 = vshrl.u32 %v1318, 7
        %v1320 = vsub.s32 0, %v1319
        %v1321 = vrot.slane %v475, %v1320
        %v1322 = vlaneseq
        %v1323 = vshrl.u32 %v1322, 7
        %v1324 = vsub.s32 0, %v1323
        %v1325 = vrot.slane %v476, %v1324
        %v1326 = vlaneseq
        %v1327 = vshrl.u32 %v1326, 7
        %v1328 = vsub.s32 0, %v1327
        %v1329 = vrot.slane %v477, %v1328
        %v1330 = vlaneseq
        %v1331 = vshrl.u32 %v1330, 7
        %v1332 = vsub.s32 0, %v1331
        %v1333 = vrot.slane %v478, %v1332
        %v1334 = vlaneseq
        %v1335 = vshrl.u32 %v1334, 7
        %v1336 = vsub.s32 0, %v1335
        %v1337 = vrot.slane %v479, %v1336
        %v1338 = vlaneseq
        %v1339 = vshrl.u32 %v1338, 7
        %v1340 = vsub.s32 0, %v1339
        %v1341 = vrot.slane %v480, %v1340
        %v1342 = vlaneseq
        %v1343 = vshrl.u32 %v1342, 7
        %v1344 = vsub.s32 0, %v1343
        %v1345 = vrot.slane %v481, %v1344
        %v1346 = vlaneseq
        %v1347 = vshrl.u32 %v1346, 7
        %v1348 = vsub.s32 0, %v1347
        %v1349 = vrot.slane %v482, %v1348
        %v1350 = vlaneseq
        %v1351 = vshrl.u32 %v1350, 7
        %v1352 = vsub.s32 0, %v1351
        %v1353 = vrot.slane %v483, %v1352
        %v1354 = vlaneseq
        %v1355 = vshrl.u32 %v1354, 7
        %v1356 = vsub.s32 0, %v1355
        %v1357 = vrot.slane %v484, %v1356
        %vm1358 = vcmp.eq.s32.totalorder %v486, %v1321
        %vm1359 = vcmp.eq.s32.totalorder %v487, %v1321
        %vm1360 = vcmp.eq.s32.totalorder %v486, %v1325
        %vm1361 = vcmp.eq.s32.totalorder %v487, %v1325
        %vm1362 = vcmp.eq.s32.totalorder %v486, %v1329
        %vm1363 = vcmp.eq.s32.totalorder %v487, %v1329
        %vm1364 = vcmp.eq.s32.totalorder %v486, %v1333
        %vm1365 = vcmp.eq.s32.totalorder %v487, %v1333
        %vm1366 = vcmp.eq.s32.totalorder %v486, %v1337
        %vm1367 = vcmp.eq.s32.totalorder %v487, %v1337
        %vm1368 = vcmp.eq.s32.totalorder %v486, %v1341
        %vm1369 = vcmp.eq.s32.totalorder %v487, %v1341
        %vm1370 = vcmp.eq.s32.totalorder %v486, %v1345
        %vm1371 = vcmp.eq.s32.totalorder %v487, %v1345
        %vm1372 = vcmp.eq.s32.totalorder %v486, %v1349
        %vm1373 = vcmp.eq.s32.totalorder %v487, %v1349
        %vm1374 = vcmp.eq.s32.totalorder %v486, %v1353
        %vm1375 = vcmp.eq.s32.totalorder %v487, %v1353
        %vm1376 = vcmp.eq.s32.totalorder %v486, %v1357
        %vm1377 = vcmp.eq.s32.totalorder %v487, %v1357
        %v1378 = vsel %vm1358, 1, 0
        %v1379 = vsel %vm1359, 1, 0
        %v1380 = vsel %vm1360, 1, 0
        %v1381 = vsel %vm1361, 1, 0
        %v1382 = vsel %vm1362, 1, 0
        %v1383 = vsel %vm1363, 1, 0
        %v1384 = vsel %vm1364, 1, 0
        %v1385 = vsel %vm1365, 1, 0
        %v1386 = vsel %vm1366, 1, 0
        %v1387 = vsel %vm1367, 1, 0
        %v1388 = vsel %vm1368, 1, 0
        %v1389 = vsel %vm1369, 1, 0
        %v1390 = vsel %vm1370, 1, 0
        %v1391 = vsel %vm1371, 1, 0
        %v1392 = vsel %vm1372, 1, 0
        %v1393 = vsel %vm1373, 1, 0
        %v1394 = vsel %vm1374, 1, 0
        %v1395 = vsel %vm1375, 1, 0
        %v1396 = vsel %vm1376, 1, 0
        %v1397 = vsel %vm1377, 1, 0
        %v1398 = vcvt.s32.f32 %v1378
        %v1399 = vcvt.s32.f32 %v1379
        %v1400 = vcvt.s32.f32 %v1380
        %v1401 = vcvt.s32.f32 %v1381
        %v1402 = vcvt.s32.f32 %v1382
        %v1403 = vcvt.s32.f32 %v1383
        %v1404 = vcvt.s32.f32 %v1384
        %v1405 = vcvt.s32.f32 %v1385
        %v1406 = vcvt.s32.f32 %v1386
        %v1407 = vcvt.s32.f32 %v1387
        %v1408 = vcvt.s32.f32 %v1388
        %v1409 = vcvt.s32.f32 %v1389
        %v1410 = vcvt.s32.f32 %v1390
        %v1411 = vcvt.s32.f32 %v1391
        %v1412 = vcvt.s32.f32 %v1392
        %v1413 = vcvt.s32.f32 %v1393
        %v1414 = vcvt.s32.f32 %v1394
        %v1415 = vcvt.s32.f32 %v1395
        %v1416 = vcvt.s32.f32 %v1396
        %v1417 = vcvt.s32.f32 %v1397
        %v1418 = vpack.c.bf16 %v1399, %v1398
        %v1419 = vpack.c.bf16 %v1401, %v1400
        %v1420 = vpack.c.bf16 %v1403, %v1402
        %v1421 = vpack.c.bf16 %v1405, %v1404
        %v1422 = vpack.c.bf16 %v1407, %v1406
        %v1423 = vpack.c.bf16 %v1409, %v1408
        %v1424 = vpack.c.bf16 %v1411, %v1410
        %v1425 = vpack.c.bf16 %v1413, %v1412
        %v1426 = vpack.c.bf16 %v1415, %v1414
        %v1427 = vpack.c.bf16 %v1417, %v1416
        %v1428 = vld [vmem:[#allocation7] sm:$0xff]
        %v1429 = vld [vmem:[#allocation7 + $0x8] sm:$0xff]
        %v1430 = vld [vmem:[#allocation7 + $0x10] sm:$0xff]
        %v1431 = vld [vmem:[#allocation7 + $0x18] sm:$0xff]
        %v1432 = vld [vmem:[#allocation7 + $0x20] sm:$0xff]
        %v1433 = vld [vmem:[#allocation7 + $0x28] sm:$0xff]
        %v1434 = vld [vmem:[#allocation7 + $0x30] sm:$0xff]
        %v1435 = vld [vmem:[#allocation7 + $0x38] sm:$0xff]
        %v1436 = vld [vmem:[#allocation7 + $0x40] sm:$0xff]
        %v1437 = vld [vmem:[#allocation7 + $0x48] sm:$0xff]
        %v1438 = vld [vmem:[#allocation7 + $0x50] sm:$0xff]
        %v1439 = vld [vmem:[#allocation7 + $0x58] sm:$0xff]
        %v1440 = vld [vmem:[#allocation7 + $0x60] sm:$0xff]
        %v1441 = vld [vmem:[#allocation7 + $0x68] sm:$0xff]
        %v1442 = vld [vmem:[#allocation7 + $0x70] sm:$0xff]
        %v1443 = vld [vmem:[#allocation7 + $0x78] sm:$0xff]
        %v1444 = vld [vmem:[#allocation7 + $0x80] sm:$0xff]
        %v1445 = vld [vmem:[#allocation7 + $0x88] sm:$0xff]
        %v1446 = vld [vmem:[#allocation7 + $0x90] sm:$0xff]
        %v1447 = vld [vmem:[#allocation7 + $0x98] sm:$0xff]
        %v1448 = vld [vmem:[#allocation7 + $0xa0] sm:$0xff]
        %v1449 = vld [vmem:[#allocation7 + $0xa8] sm:$0xff]
        %v1450 = vld [vmem:[#allocation7 + $0xb0] sm:$0xff]
        %v1451 = vld [vmem:[#allocation7 + $0xb8] sm:$0xff]
        %v1452 = vld [vmem:[#allocation7 + $0xc0] sm:$0xff]
        %v1453 = vld [vmem:[#allocation7 + $0xc8] sm:$0xff]
        %v1454 = vld [vmem:[#allocation7 + $0xd0] sm:$0xff]
        %v1455 = vld [vmem:[#allocation7 + $0xd8] sm:$0xff]
        %v1456 = vld [vmem:[%s3] sm:$0xff]
        %v1457 = vld [vmem:[%s3 + $0x8] sm:$0xff]
        %v1458 = vld [vmem:[%s3 + $0x10] sm:$0xff]
        %v1459 = vld [vmem:[%s3 + $0x18] sm:$0xff]
        %v1464 = vunpack.c.l.b16 %v1456
        %v1465 = vunpack.c.h.b16 %v1456
        %v1466 = vunpack.c.l.b16 %v1457
        %v1467 = vunpack.c.h.b16 %v1457
        %v1468 = vunpack.c.l.b16 %v1458
        %v1469 = vunpack.c.h.b16 %v1458
        %v1470 = vunpack.c.l.b16 %v1459
        %v1471 = vunpack.c.h.b16 %v1459
        %v1472 = vpack.c.b16 %v1466, %v1464
        %v1473 = vpack.c.b16 %v1467, %v1465
        %v1474 = vpack.c.b16 %v1470, %v1468
        %v1475 = vpack.c.b16 %v1471, %v1469
        %vm1478 = vcmask 261120
        %v1480 = vsel %vm1478, %v1473, 0
        %v1483 = vsel %vm1478, %v1475, 0
        %1485 = vmatprep.subr.bf16.mxu0 0
        %1486 = vmatpush1.bf16.msra.mxu0 %v1425
        %1487 = vmatprep.subr.bf16.mxu0 0
        %1488 = vmatpush1.bf16.msra.mxu0 %v1424
        %1489 = vmatprep.subr.bf16.mxu0 0
        %1490 = vmatpush1.bf16.msra.mxu0 %v1423
        %1491 = vmatprep.subr.bf16.mxu0 0
        %1492 = vmatpush1.bf16.msra.mxu0 %v1422
        %1493 = vmatprep.subr.bf16.mxu0 0
        %1494 = vmatpush1.bf16.msra.mxu0 %v1421
        %1495 = vmatprep.subr.bf16.mxu0 0
        %1496 = vmatpush1.bf16.msra.mxu0 %v1420
        %1497 = vmatprep.subr.bf16.mxu0 0
        %1498 = vmatpush1.bf16.msra.mxu0 %v1419
        %1499 = vmatprep.subr.bf16.mxu0 0
        %1500 = vmatpush1.bf16.msra.mxu0 %v1418
        %1501 = vmatprep.subr.bf16.mxu0 0
        %1502 = vmatpush2.bf16.msra.mxu0 0
        %1503 = vmatprep.subr.bf16.mxu0 0
        %1504 = vmatpush2.bf16.msra.mxu0 0
        %1505 = vmatprep.subr.bf16.mxu0 0
        %1506 = vmatpush2.bf16.msra.mxu0 0
        %1507 = vmatprep.subr.bf16.mxu0 0
        %1508 = vmatpush2.bf16.msra.mxu0 0
        %1509 = vmatprep.subr.bf16.mxu0 0
        %1510 = vmatpush2.bf16.msra.mxu0 0
        %1511 = vmatprep.subr.bf16.mxu0 0
        %1512 = vmatpush2.bf16.msra.mxu0 0
        %1513 = vmatprep.subr.bf16.mxu0 0
        %1514 = vmatpush2.bf16.msra.mxu0 %v1427
        %1515 = vmatprep.subr.bf16.mxu0 0
        %1516 = vmatpush2.bf16.msra.mxu0 %v1426
        %1517 = vmatprep.mubr.bf16.mxu0 %v1480
        %1518 = vmatmul.mubr.bf16.gmra.mxu0 %v1472
        %v1519 = vpop.f32.mrf.mxu0
        %v1520 = vadd.f32 0.0, %v1519
        %v1521 = vpop.f32.mrf.mxu0
        %v1522 = vpop.f32.mrf.mxu0
        %v1523 = vadd.f32 0.0, %v1522
        %v1524 = vpop.f32.mrf.mxu0
        %1525 = vmatprep.mubr.bf16.mxu0 %v1483
        %1526 = vmatmul.mubr.bf16.gmra.mxu0 %v1474
        %v1527 = vpop.f32.mrf.mxu0
        %v1528 = vadd.f32 0.0, %v1527
        %v1529 = vpop.f32.mrf.mxu0
        %v1530 = vpop.f32.mrf.mxu0
        %v1531 = vadd.f32 0.0, %v1530
        %v1532 = vpop.f32.mrf.mxu0
        %1533 = vdwg.mxu0
        %v1562 = vunpack.c.l.b16 %v1428
        %v1563 = vunpack.c.h.b16 %v1428
        %v1564 = vunpack.c.l.b16 %v1429
        %v1565 = vunpack.c.h.b16 %v1429
        %v1566 = vunpack.c.l.b16 %v1430
        %v1567 = vunpack.c.h.b16 %v1430
        %v1568 = vunpack.c.l.b16 %v1431
        %v1569 = vunpack.c.h.b16 %v1431
        %v1570 = vunpack.c.l.b16 %v1432
        %v1571 = vunpack.c.h.b16 %v1432
        %v1572 = vunpack.c.l.b16 %v1433
        %v1573 = vunpack.c.h.b16 %v1433
        %v1574 = vunpack.c.l.b16 %v1434
        %v1575 = vunpack.c.h.b16 %v1434
        %v1576 = vunpack.c.l.b16 %v1435
        %v1577 = vunpack.c.h.b16 %v1435
        %v1578 = vunpack.c.l.b16 %v1436
        %v1579 = vunpack.c.h.b16 %v1436
        %v1580 = vunpack.c.l.b16 %v1437
        %v1581 = vunpack.c.h.b16 %v1437
        %v1582 = vunpack.c.l.b16 %v1438
        %v1583 = vunpack.c.h.b16 %v1438
        %v1584 = vunpack.c.l.b16 %v1439
        %v1585 = vunpack.c.h.b16 %v1439
        %v1586 = vunpack.c.l.b16 %v1440
        %v1587 = vunpack.c.h.b16 %v1440
        %v1588 = vunpack.c.l.b16 %v1441
        %v1589 = vunpack.c.h.b16 %v1441
        %v1590 = vunpack.c.l.b16 %v1442
        %v1591 = vunpack.c.h.b16 %v1442
        %v1592 = vunpack.c.l.b16 %v1443
        %v1593 = vunpack.c.h.b16 %v1443
        %v1594 = vunpack.c.l.b16 %v1444
        %v1595 = vunpack.c.h.b16 %v1444
        %v1596 = vunpack.c.l.b16 %v1445
        %v1597 = vunpack.c.h.b16 %v1445
        %v1598 = vunpack.c.l.b16 %v1446
        %v1599 = vunpack.c.h.b16 %v1446
        %v1600 = vunpack.c.l.b16 %v1447
        %v1601 = vunpack.c.h.b16 %v1447
        %v1602 = vunpack.c.l.b16 %v1448
        %v1603 = vunpack.c.h.b16 %v1448
        %v1604 = vunpack.c.l.b16 %v1449
        %v1605 = vunpack.c.h.b16 %v1449
        %v1606 = vunpack.c.l.b16 %v1450
        %v1607 = vunpack.c.h.b16 %v1450
        %v1608 = vunpack.c.l.b16 %v1451
        %v1609 = vunpack.c.h.b16 %v1451
        %v1610 = vunpack.c.l.b16 %v1452
        %v1611 = vunpack.c.h.b16 %v1452
        %v1612 = vunpack.c.l.b16 %v1453
        %v1613 = vunpack.c.h.b16 %v1453
        %v1614 = vunpack.c.l.b16 %v1454
        %v1615 = vunpack.c.h.b16 %v1454
        %v1616 = vunpack.c.l.b16 %v1455
        %v1617 = vunpack.c.h.b16 %v1455
        %v1618 = vpack.c.b16 %v1576, %v1562
        %v1619 = vpack.c.b16 %v1577, %v1563
        %v1620 = vpack.c.b16 %v1578, %v1564
        %v1621 = vpack.c.b16 %v1579, %v1565
        %v1622 = vpack.c.b16 %v1580, %v1566
        %v1623 = vpack.c.b16 %v1581, %v1567
        %v1624 = vpack.c.b16 %v1582, %v1568
        %v1625 = vpack.c.b16 %v1583, %v1569
        %v1626 = vpack.c.b16 %v1584, %v1570
        %v1627 = vpack.c.b16 %v1585, %v1571
        %v1628 = vpack.c.b16 %v1586, %v1572
        %v1629 = vpack.c.b16 %v1587, %v1573
        %v1630 = vpack.c.b16 %v1588, %v1574
        %v1631 = vpack.c.b16 %v1589, %v1575
        %v1632 = vpack.c.b16 %v1604, %v1590
        %v1633 = vpack.c.b16 %v1605, %v1591
        %v1634 = vpack.c.b16 %v1606, %v1592
        %v1635 = vpack.c.b16 %v1607, %v1593
        %v1636 = vpack.c.b16 %v1608, %v1594
        %v1637 = vpack.c.b16 %v1609, %v1595
        %v1638 = vpack.c.b16 %v1610, %v1596
        %v1639 = vpack.c.b16 %v1611, %v1597
        %v1640 = vpack.c.b16 %v1612, %v1598
        %v1641 = vpack.c.b16 %v1613, %v1599
        %v1642 = vpack.c.b16 %v1614, %v1600
        %v1643 = vpack.c.b16 %v1615, %v1601
        %v1644 = vpack.c.b16 %v1616, %v1602
        %v1645 = vpack.c.b16 %v1617, %v1603
        %vm1672 = vcmask 785408
        %v1674 = vsel %vm1672, %v1631, 0
        %v1677 = vsel %vm1672, %v1645, 0
        %1679 = vmatprep.subr.bf16.mxu0 0
        %1680 = vmatpush1.bf16.msra.mxu0 %v1215
        %1681 = vmatprep.subr.bf16.mxu0 0
        %1682 = vmatpush1.bf16.msra.mxu0 %v1214
        %1683 = vmatprep.subr.bf16.mxu0 0
        %1684 = vmatpush1.bf16.msra.mxu0 %v1213
        %1685 = vmatprep.subr.bf16.mxu0 0
        %1686 = vmatpush1.bf16.msra.mxu0 %v1212
        %1687 = vmatprep.subr.bf16.mxu0 0
        %1688 = vmatpush1.bf16.msra.mxu0 %v1211
        %1689 = vmatprep.subr.bf16.mxu0 0
        %1690 = vmatpush1.bf16.msra.mxu0 %v1210
        %1691 = vmatprep.subr.bf16.mxu0 0
        %1692 = vmatpush1.bf16.msra.mxu0 %v1209
        %1693 = vmatprep.subr.bf16.mxu0 0
        %1694 = vmatpush1.bf16.msra.mxu0 %v1208
        %1695 = vmatprep.subr.bf16.mxu0 0
        %1696 = vmatpush2.bf16.msra.mxu0 %v1223
        %1697 = vmatprep.subr.bf16.mxu0 0
        %1698 = vmatpush2.bf16.msra.mxu0 %v1222
        %1699 = vmatprep.subr.bf16.mxu0 0
        %1700 = vmatpush2.bf16.msra.mxu0 %v1221
        %1701 = vmatprep.subr.bf16.mxu0 0
        %1702 = vmatpush2.bf16.msra.mxu0 %v1220
        %1703 = vmatprep.subr.bf16.mxu0 0
        %1704 = vmatpush2.bf16.msra.mxu0 %v1219
        %1705 = vmatprep.subr.bf16.mxu0 0
        %1706 = vmatpush2.bf16.msra.mxu0 %v1218
        %1707 = vmatprep.subr.bf16.mxu0 0
        %1708 = vmatpush2.bf16.msra.mxu0 %v1217
        %1709 = vmatprep.subr.bf16.mxu0 0
        %1710 = vmatpush2.bf16.msra.mxu0 %v1216
        %1711 = vmatprep.mubr.bf16.mxu0 %v1619
        %1712 = vmatmul.mubr.bf16.gmra.mxu0 %v1618
        %v1713 = vpop.f32.mrf.mxu0
        %v1714 = vadd.f32 %v1520, %v1713
        %v1715 = vpop.f32.mrf.mxu0
        %v1716 = vpop.f32.mrf.mxu0
        %v1717 = vadd.f32 %v1523, %v1716
        %v1718 = vpop.f32.mrf.mxu0
        %1719 = vmatprep.mubr.bf16.mxu0 %v1633
        %1720 = vmatmul.mubr.bf16.gmra.mxu0 %v1632
        %v1721 = vpop.f32.mrf.mxu0
        %v1722 = vadd.f32 %v1528, %v1721
        %v1723 = vpop.f32.mrf.mxu0
        %v1724 = vpop.f32.mrf.mxu0
        %v1725 = vadd.f32 %v1531, %v1724
        %v1726 = vpop.f32.mrf.mxu0
        %1727 = vdwg.mxu0
        %1728 = vmatprep.subr.bf16.mxu0 0
        %1729 = vmatpush1.bf16.msra.mxu0 %v1231
        %1730 = vmatprep.subr.bf16.mxu0 0
        %1731 = vmatpush1.bf16.msra.mxu0 %v1230
        %1732 = vmatprep.subr.bf16.mxu0 0
        %1733 = vmatpush1.bf16.msra.mxu0 %v1229
        %1734 = vmatprep.subr.bf16.mxu0 0
        %1735 = vmatpush1.bf16.msra.mxu0 %v1228
        %1736 = vmatprep.subr.bf16.mxu0 0
        %1737 = vmatpush1.bf16.msra.mxu0 %v1227
        %1738 = vmatprep.subr.bf16.mxu0 0
        %1739 = vmatpush1.bf16.msra.mxu0 %v1226
        %1740 = vmatprep.subr.bf16.mxu0 0
        %1741 = vmatpush1.bf16.msra.mxu0 %v1225
        %1742 = vmatprep.subr.bf16.mxu0 0
        %1743 = vmatpush1.bf16.msra.mxu0 %v1224
        %1744 = vmatprep.subr.bf16.mxu0 0
        %1745 = vmatpush2.bf16.msra.mxu0 %v1239
        %1746 = vmatprep.subr.bf16.mxu0 0
        %1747 = vmatpush2.bf16.msra.mxu0 %v1238
        %1748 = vmatprep.subr.bf16.mxu0 0
        %1749 = vmatpush2.bf16.msra.mxu0 %v1237
        %1750 = vmatprep.subr.bf16.mxu0 0
        %1751 = vmatpush2.bf16.msra.mxu0 %v1236
        %1752 = vmatprep.subr.bf16.mxu0 0
        %1753 = vmatpush2.bf16.msra.mxu0 %v1235
        %1754 = vmatprep.subr.bf16.mxu0 0
        %1755 = vmatpush2.bf16.msra.mxu0 %v1234
        %1756 = vmatprep.subr.bf16.mxu0 0
        %1757 = vmatpush2.bf16.msra.mxu0 %v1233
        %1758 = vmatprep.subr.bf16.mxu0 0
        %1759 = vmatpush2.bf16.msra.mxu0 %v1232
        %1760 = vmatprep.mubr.bf16.mxu0 %v1621
        %1761 = vmatmul.mubr.bf16.gmra.mxu0 %v1620
        %v1762 = vpop.f32.mrf.mxu0
        %v1763 = vadd.f32 %v1714, %v1762
        %v1764 = vpop.f32.mrf.mxu0
        %v1765 = vpop.f32.mrf.mxu0
        %v1766 = vadd.f32 %v1717, %v1765
        %v1767 = vpop.f32.mrf.mxu0
        %1768 = vmatprep.mubr.bf16.mxu0 %v1635
        %1769 = vmatmul.mubr.bf16.gmra.mxu0 %v1634
        %v1770 = vpop.f32.mrf.mxu0
        %v1771 = vadd.f32 %v1722, %v1770
        %v1772 = vpop.f32.mrf.mxu0
        %v1773 = vpop.f32.mrf.mxu0
        %v1774 = vadd.f32 %v1725, %v1773
        %v1775 = vpop.f32.mrf.mxu0
        %1776 = vdwg.mxu0
        %1777 = vmatprep.subr.bf16.mxu0 0
        %1778 = vmatpush1.bf16.msra.mxu0 %v1247
        %1779 = vmatprep.subr.bf16.mxu0 0
        %1780 = vmatpush1.bf16.msra.mxu0 %v1246
        %1781 = vmatprep.subr.bf16.mxu0 0
        %1782 = vmatpush1.bf16.msra.mxu0 %v1245
        %1783 = vmatprep.subr.bf16.mxu0 0
        %1784 = vmatpush1.bf16.msra.mxu0 %v1244
        %1785 = vmatprep.subr.bf16.mxu0 0
        %1786 = vmatpush1.bf16.msra.mxu0 %v1243
        %1787 = vmatprep.subr.bf16.mxu0 0
        %1788 = vmatpush1.bf16.msra.mxu0 %v1242
        %1789 = vmatprep.subr.bf16.mxu0 0
        %1790 = vmatpush1.bf16.msra.mxu0 %v1241
        %1791 = vmatprep.subr.bf16.mxu0 0
        %1792 = vmatpush1.bf16.msra.mxu0 %v1240
        %1793 = vmatprep.subr.bf16.mxu0 0
        %1794 = vmatpush2.bf16.msra.mxu0 %v1255
        %1795 = vmatprep.subr.bf16.mxu0 0
        %1796 = vmatpush2.bf16.msra.mxu0 %v1254
        %1797 = vmatprep.subr.bf16.mxu0 0
        %1798 = vmatpush2.bf16.msra.mxu0 %v1253
        %1799 = vmatprep.subr.bf16.mxu0 0
        %1800 = vmatpush2.bf16.msra.mxu0 %v1252
        %1801 = vmatprep.subr.bf16.mxu0 0
        %1802 = vmatpush2.bf16.msra.mxu0 %v1251
        %1803 = vmatprep.subr.bf16.mxu0 0
        %1804 = vmatpush2.bf16.msra.mxu0 %v1250
        %1805 = vmatprep.subr.bf16.mxu0 0
        %1806 = vmatpush2.bf16.msra.mxu0 %v1249
        %1807 = vmatprep.subr.bf16.mxu0 0
        %1808 = vmatpush2.bf16.msra.mxu0 %v1248
        %1809 = vmatprep.mubr.bf16.mxu0 %v1623
        %1810 = vmatmul.mubr.bf16.gmra.mxu0 %v1622
        %v1811 = vpop.f32.mrf.mxu0
        %v1812 = vadd.f32 %v1763, %v1811
        %v1813 = vpop.f32.mrf.mxu0
        %v1814 = vpop.f32.mrf.mxu0
        %v1815 = vadd.f32 %v1766, %v1814
        %v1816 = vpop.f32.mrf.mxu0
        %1817 = vmatprep.mubr.bf16.mxu0 %v1637
        %1818 = vmatmul.mubr.bf16.gmra.mxu0 %v1636
        %v1819 = vpop.f32.mrf.mxu0
        %v1820 = vadd.f32 %v1771, %v1819
        %v1821 = vpop.f32.mrf.mxu0
        %v1822 = vpop.f32.mrf.mxu0
        %v1823 = vadd.f32 %v1774, %v1822
        %v1824 = vpop.f32.mrf.mxu0
        %1825 = vdwg.mxu0
        %1826 = vmatprep.subr.bf16.mxu0 0
        %1827 = vmatpush1.bf16.msra.mxu0 %v1263
        %1828 = vmatprep.subr.bf16.mxu0 0
        %1829 = vmatpush1.bf16.msra.mxu0 %v1262
        %1830 = vmatprep.subr.bf16.mxu0 0
        %1831 = vmatpush1.bf16.msra.mxu0 %v1261
        %1832 = vmatprep.subr.bf16.mxu0 0
        %1833 = vmatpush1.bf16.msra.mxu0 %v1260
        %1834 = vmatprep.subr.bf16.mxu0 0
        %1835 = vmatpush1.bf16.msra.mxu0 %v1259
        %1836 = vmatprep.subr.bf16.mxu0 0
        %1837 = vmatpush1.bf16.msra.mxu0 %v1258
        %1838 = vmatprep.subr.bf16.mxu0 0
        %1839 = vmatpush1.bf16.msra.mxu0 %v1257
        %1840 = vmatprep.subr.bf16.mxu0 0
        %1841 = vmatpush1.bf16.msra.mxu0 %v1256
        %1842 = vmatprep.subr.bf16.mxu0 0
        %1843 = vmatpush2.bf16.msra.mxu0 %v1271
        %1844 = vmatprep.subr.bf16.mxu0 0
        %1845 = vmatpush2.bf16.msra.mxu0 %v1270
        %1846 = vmatprep.subr.bf16.mxu0 0
        %1847 = vmatpush2.bf16.msra.mxu0 %v1269
        %1848 = vmatprep.subr.bf16.mxu0 0
        %1849 = vmatpush2.bf16.msra.mxu0 %v1268
        %1850 = vmatprep.subr.bf16.mxu0 0
        %1851 = vmatpush2.bf16.msra.mxu0 %v1267
        %1852 = vmatprep.subr.bf16.mxu0 0
        %1853 = vmatpush2.bf16.msra.mxu0 %v1266
        %1854 = vmatprep.subr.bf16.mxu0 0
        %1855 = vmatpush2.bf16.msra.mxu0 %v1265
        %1856 = vmatprep.subr.bf16.mxu0 0
        %1857 = vmatpush2.bf16.msra.mxu0 %v1264
        %1858 = vmatprep.mubr.bf16.mxu0 %v1625
        %1859 = vmatmul.mubr.bf16.gmra.mxu0 %v1624
        %v1860 = vpop.f32.mrf.mxu0
        %v1861 = vadd.f32 %v1812, %v1860
        %v1862 = vpop.f32.mrf.mxu0
        %v1863 = vpop.f32.mrf.mxu0
        %v1864 = vadd.f32 %v1815, %v1863
        %v1865 = vpop.f32.mrf.mxu0
        %1866 = vmatprep.mubr.bf16.mxu0 %v1639
        %1867 = vmatmul.mubr.bf16.gmra.mxu0 %v1638
        %v1868 = vpop.f32.mrf.mxu0
        %v1869 = vadd.f32 %v1820, %v1868
        %v1870 = vpop.f32.mrf.mxu0
        %v1871 = vpop.f32.mrf.mxu0
        %v1872 = vadd.f32 %v1823, %v1871
        %v1873 = vpop.f32.mrf.mxu0
        %1874 = vdwg.mxu0
        %1875 = vmatprep.subr.bf16.mxu0 0
        %1876 = vmatpush1.bf16.msra.mxu0 %v1279
        %1877 = vmatprep.subr.bf16.mxu0 0
        %1878 = vmatpush1.bf16.msra.mxu0 %v1278
        %1879 = vmatprep.subr.bf16.mxu0 0
        %1880 = vmatpush1.bf16.msra.mxu0 %v1277
        %1881 = vmatprep.subr.bf16.mxu0 0
        %1882 = vmatpush1.bf16.msra.mxu0 %v1276
        %1883 = vmatprep.subr.bf16.mxu0 0
        %1884 = vmatpush1.bf16.msra.mxu0 %v1275
        %1885 = vmatprep.subr.bf16.mxu0 0
        %1886 = vmatpush1.bf16.msra.mxu0 %v1274
        %1887 = vmatprep.subr.bf16.mxu0 0
        %1888 = vmatpush1.bf16.msra.mxu0 %v1273
        %1889 = vmatprep.subr.bf16.mxu0 0
        %1890 = vmatpush1.bf16.msra.mxu0 %v1272
        %1891 = vmatprep.subr.bf16.mxu0 0
        %1892 = vmatpush2.bf16.msra.mxu0 %v1287
        %1893 = vmatprep.subr.bf16.mxu0 0
        %1894 = vmatpush2.bf16.msra.mxu0 %v1286
        %1895 = vmatprep.subr.bf16.mxu0 0
        %1896 = vmatpush2.bf16.msra.mxu0 %v1285
        %1897 = vmatprep.subr.bf16.mxu0 0
        %1898 = vmatpush2.bf16.msra.mxu0 %v1284
        %1899 = vmatprep.subr.bf16.mxu0 0
        %1900 = vmatpush2.bf16.msra.mxu0 %v1283
        %1901 = vmatprep.subr.bf16.mxu0 0
        %1902 = vmatpush2.bf16.msra.mxu0 %v1282
        %1903 = vmatprep.subr.bf16.mxu0 0
        %1904 = vmatpush2.bf16.msra.mxu0 %v1281
        %1905 = vmatprep.subr.bf16.mxu0 0
        %1906 = vmatpush2.bf16.msra.mxu0 %v1280
        %1907 = vmatprep.mubr.bf16.mxu0 %v1627
        %1908 = vmatmul.mubr.bf16.gmra.mxu0 %v1626
        %v1909 = vpop.f32.mrf.mxu0
        %v1910 = vadd.f32 %v1861, %v1909
        %v1911 = vpop.f32.mrf.mxu0
        %v1912 = vpop.f32.mrf.mxu0
        %v1913 = vadd.f32 %v1864, %v1912
        %v1914 = vpop.f32.mrf.mxu0
        %1915 = vmatprep.mubr.bf16.mxu0 %v1641
        %1916 = vmatmul.mubr.bf16.gmra.mxu0 %v1640
        %v1917 = vpop.f32.mrf.mxu0
        %v1918 = vadd.f32 %v1869, %v1917
        %v1919 = vpop.f32.mrf.mxu0
        %v1920 = vpop.f32.mrf.mxu0
        %v1921 = vadd.f32 %v1872, %v1920
        %v1922 = vpop.f32.mrf.mxu0
        %1923 = vdwg.mxu0
        %1924 = vmatprep.subr.bf16.mxu0 0
        %1925 = vmatpush1.bf16.msra.mxu0 %v1295
        %1926 = vmatprep.subr.bf16.mxu0 0
        %1927 = vmatpush1.bf16.msra.mxu0 %v1294
        %1928 = vmatprep.subr.bf16.mxu0 0
        %1929 = vmatpush1.bf16.msra.mxu0 %v1293
        %1930 = vmatprep.subr.bf16.mxu0 0
        %1931 = vmatpush1.bf16.msra.mxu0 %v1292
        %1932 = vmatprep.subr.bf16.mxu0 0
        %1933 = vmatpush1.bf16.msra.mxu0 %v1291
        %1934 = vmatprep.subr.bf16.mxu0 0
        %1935 = vmatpush1.bf16.msra.mxu0 %v1290
        %1936 = vmatprep.subr.bf16.mxu0 0
        %1937 = vmatpush1.bf16.msra.mxu0 %v1289
        %1938 = vmatprep.subr.bf16.mxu0 0
        %1939 = vmatpush1.bf16.msra.mxu0 %v1288
        %1940 = vmatprep.subr.bf16.mxu0 0
        %1941 = vmatpush2.bf16.msra.mxu0 %v1303
        %1942 = vmatprep.subr.bf16.mxu0 0
        %1943 = vmatpush2.bf16.msra.mxu0 %v1302
        %1944 = vmatprep.subr.bf16.mxu0 0
        %1945 = vmatpush2.bf16.msra.mxu0 %v1301
        %1946 = vmatprep.subr.bf16.mxu0 0
        %1947 = vmatpush2.bf16.msra.mxu0 %v1300
        %1948 = vmatprep.subr.bf16.mxu0 0
        %1949 = vmatpush2.bf16.msra.mxu0 %v1299
        %1950 = vmatprep.subr.bf16.mxu0 0
        %1951 = vmatpush2.bf16.msra.mxu0 %v1298
        %1952 = vmatprep.subr.bf16.mxu0 0
        %1953 = vmatpush2.bf16.msra.mxu0 %v1297
        %1954 = vmatprep.subr.bf16.mxu0 0
        %1955 = vmatpush2.bf16.msra.mxu0 %v1296
        %1956 = vmatprep.mubr.bf16.mxu0 %v1629
        %1957 = vmatmul.mubr.bf16.gmra.mxu0 %v1628
        %v1958 = vpop.f32.mrf.mxu0
        %v1959 = vadd.f32 %v1910, %v1958
        %v1960 = vpop.f32.mrf.mxu0
        %v1961 = vpop.f32.mrf.mxu0
        %v1962 = vadd.f32 %v1913, %v1961
        %v1963 = vpop.f32.mrf.mxu0
        %1964 = vmatprep.mubr.bf16.mxu0 %v1643
        %1965 = vmatmul.mubr.bf16.gmra.mxu0 %v1642
        %v1966 = vpop.f32.mrf.mxu0
        %v1967 = vadd.f32 %v1918, %v1966
        %v1968 = vpop.f32.mrf.mxu0
        %v1969 = vpop.f32.mrf.mxu0
        %v1970 = vadd.f32 %v1921, %v1969
        %v1971 = vpop.f32.mrf.mxu0
        %1972 = vdwg.mxu0
        %1973 = vmatprep.subr.bf16.mxu0 0
        %1974 = vmatpush1.bf16.msra.mxu0 %v1311
        %1975 = vmatprep.subr.bf16.mxu0 0
        %1976 = vmatpush1.bf16.msra.mxu0 %v1310
        %1977 = vmatprep.subr.bf16.mxu0 0
        %1978 = vmatpush1.bf16.msra.mxu0 %v1309
        %1979 = vmatprep.subr.bf16.mxu0 0
        %1980 = vmatpush1.bf16.msra.mxu0 %v1308
        %1981 = vmatprep.subr.bf16.mxu0 0
        %1982 = vmatpush1.bf16.msra.mxu0 %v1307
        %1983 = vmatprep.subr.bf16.mxu0 0
        %1984 = vmatpush1.bf16.msra.mxu0 %v1306
        %1985 = vmatprep.subr.bf16.mxu0 0
        %1986 = vmatpush1.bf16.msra.mxu0 %v1305
        %1987 = vmatprep.subr.bf16.mxu0 0
        %1988 = vmatpush1.bf16.msra.mxu0 %v1304
        %1989 = vmatprep.subr.bf16.mxu0 0
        %1990 = vmatpush2.bf16.msra.mxu0 0
        %1991 = vmatprep.subr.bf16.mxu0 0
        %1992 = vmatpush2.bf16.msra.mxu0 0
        %1993 = vmatprep.subr.bf16.mxu0 0
        %1994 = vmatpush2.bf16.msra.mxu0 %v1317
        %1995 = vmatprep.subr.bf16.mxu0 0
        %1996 = vmatpush2.bf16.msra.mxu0 %v1316
        %1997 = vmatprep.subr.bf16.mxu0 0
        %1998 = vmatpush2.bf16.msra.mxu0 %v1315
        %1999 = vmatprep.subr.bf16.mxu0 0
        %2000 = vmatpush2.bf16.msra.mxu0 %v1314
        %2001 = vmatprep.subr.bf16.mxu0 0
        %2002 = vmatpush2.bf16.msra.mxu0 %v1313
        %2003 = vmatprep.subr.bf16.mxu0 0
        %2004 = vmatpush2.bf16.msra.mxu0 %v1312
        %2005 = vmatprep.mubr.bf16.mxu0 %v1674
        %2006 = vmatmul.mubr.bf16.gmra.mxu0 %v1630
        %v2007 = vpop.f32.mrf.mxu0
        %v2008 = vadd.f32 %v1959, %v2007
        %v2009 = vpop.f32.mrf.mxu0
        %v2010 = vpop.f32.mrf.mxu0
        %v2011 = vadd.f32 %v1962, %v2010
        %v2012 = vpop.f32.mrf.mxu0
        %2013 = vmatprep.mubr.bf16.mxu0 %v1677
        %2014 = vmatmul.mubr.bf16.gmra.mxu0 %v1644
        %v2015 = vpop.f32.mrf.mxu0
        %v2016 = vadd.f32 %v1967, %v2015
        %v2017 = vpop.f32.mrf.mxu0
        %v2018 = vpop.f32.mrf.mxu0
        %v2019 = vadd.f32 %v1970, %v2018
        %v2020 = vpop.f32.mrf.mxu0
        %2021 = vdwg.mxu0
        %v2022 = vld [vmem:[%s4] sm:$0xff]
        %v2023 = vld [vmem:[%s4 + $0x8] sm:$0xff]
        %v2024 = vld [vmem:[%s4 + $0x10] sm:$0xff]
        %v2025 = vld [vmem:[%s4 + $0x18] sm:$0xff]
        %2027 = vset.pattern.permute.xlu0 0
        %2028 = vperm.xlu0 %2027, %v2022
        %v2029 = vpop.permute.xlu0 %2028
        %2032 = vset.pattern.permute.xlu0 0
        %2033 = vperm.xlu0 %2032, %v2023
        %v2034 = vpop.permute.xlu0 %2033
        %2037 = vset.pattern.permute.xlu0 0
        %2038 = vperm.xlu0 %2037, %v2024
        %v2039 = vpop.permute.xlu0 %2038
        %2042 = vset.pattern.permute.xlu0 0
        %2043 = vperm.xlu0 %2042, %v2025
        %v2044 = vpop.permute.xlu0 %2043
        %v2046 = vadd.f32 %v2008, %v2029
        %v2047 = vadd.f32 %v2011, %v2034
        %v2048 = vadd.f32 %v2016, %v2039
        %v2049 = vadd.f32 %v2019, %v2044
        %v2050 = vmax.f32 %v2046, 0.0
        %v2051 = vmax.f32 %v2047, 0.0
        %v2052 = vmax.f32 %v2048, 0.0
        %v2053 = vmax.f32 %v2049, 0.0
        %v2054 = vld [vmem:[%s5] sm:$0xf]
        %v2055 = vld [vmem:[%s5 + $0x4] sm:$0xf]
        %v2056 = vld [vmem:[%s5 + $0x8] sm:$0xf]
        %v2057 = vld [vmem:[%s5 + $0xc] sm:$0xf]
        %v2058 = vpack.c.bf16 %v2051, %v2050
        %v2059 = vpack.c.bf16 %v2053, %v2052
        %v2060 = vld [vmem:[%s6] sm:$0xff]
        %v2061 = vld [vmem:[%s6 + $0x8] sm:$0xff]
        %v2062 = vld [vmem:[%s6 + $0x10] sm:$0xff]
        %v2063 = vld [vmem:[%s6 + $0x18] sm:$0xff]
        %2065 = vset.pattern.permute.xlu0 0
        %2066 = vperm.xlu0 %2065, %v2060
        %v2067 = vpop.permute.xlu0 %2066
        %2070 = vset.pattern.permute.xlu0 0
        %2071 = vperm.xlu0 %2070, %v2061
        %v2072 = vpop.permute.xlu0 %2071
        %2075 = vset.pattern.permute.xlu0 0
        %2076 = vperm.xlu0 %2075, %v2062
        %v2077 = vpop.permute.xlu0 %2076
        %2080 = vset.pattern.permute.xlu0 0
        %2081 = vperm.xlu0 %2080, %v2063
        %v2082 = vpop.permute.xlu0 %2081
        %v2088 = vunpack.c.l.b16 %v2054
        %v2089 = vunpack.c.l.b16 %v2055
        %v2090 = vunpack.c.l.b16 %v2056
        %v2091 = vunpack.c.l.b16 %v2057
        %v2092 = vpack.c.b16 %v2089, %v2088
        %v2093 = vpack.c.b16 %v2091, %v2090
        %v2095 = vsel %vm1478, %v2092, 0
        %v2098 = vsel %vm1478, %v2093, 0
        %2100 = vmatprep.subr.bf16.mxu0 0
        %2101 = vmatpush1.bf16.msra.mxu0 0
        %2102 = vmatprep.subr.bf16.mxu0 0
        %2103 = vmatpush1.bf16.msra.mxu0 0
        %2104 = vmatprep.subr.bf16.mxu0 0
        %2105 = vmatpush1.bf16.msra.mxu0 0
        %2106 = vmatprep.subr.bf16.mxu0 0
        %2107 = vmatpush1.bf16.msra.mxu0 0
        %2108 = vmatprep.subr.bf16.mxu0 0
        %2109 = vmatpush1.bf16.msra.mxu0 0
        %2110 = vmatprep.subr.bf16.mxu0 0
        %2111 = vmatpush1.bf16.msra.mxu0 0
        %2112 = vmatprep.subr.bf16.mxu0 0
        %2113 = vmatpush1.bf16.msra.mxu0 %v2059
        %2114 = vmatprep.subr.bf16.mxu0 0
        %2115 = vmatpush1.bf16.msra.mxu0 %v2058
        %2116 = vmatprep.subr.bf16.mxu0 0
        %2117 = vmatpush2.bf16.msra.mxu0 0
        %2118 = vmatprep.subr.bf16.mxu0 0
        %2119 = vmatpush2.bf16.msra.mxu0 0
        %2120 = vmatprep.subr.bf16.mxu0 0
        %2121 = vmatpush2.bf16.msra.mxu0 0
        %2122 = vmatprep.subr.bf16.mxu0 0
        %2123 = vmatpush2.bf16.msra.mxu0 0
        %2124 = vmatprep.subr.bf16.mxu0 0
        %2125 = vmatpush2.bf16.msra.mxu0 0
        %2126 = vmatprep.subr.bf16.mxu0 0
        %2127 = vmatpush2.bf16.msra.mxu0 0
        %2128 = vmatprep.subr.bf16.mxu0 0
        %2129 = vmatpush2.bf16.msra.mxu0 0
        %2130 = vmatprep.subr.bf16.mxu0 0
        %2131 = vmatpush2.bf16.msra.mxu0 0
        %2132 = vmatprep.mubr.bf16.mxu0 0
        %2133 = vmatmul.mubr.bf16.gmra.mxu0 %v2095
        %v2134 = vpop.f32.mrf.mxu0
        %v2135 = vadd.f32 %v2067, %v2134
        %v2136 = vpop.f32.mrf.mxu0
        %v2137 = vpop.f32.mrf.mxu0
        %v2138 = vadd.f32 %v2072, %v2137
        %v2139 = vpop.f32.mrf.mxu0
        %2140 = vmatprep.mubr.bf16.mxu0 0
        %2141 = vmatmul.mubr.bf16.gmra.mxu0 %v2098
        %v2142 = vpop.f32.mrf.mxu0
        %v2143 = vadd.f32 %v2077, %v2142
        %v2144 = vpop.f32.mrf.mxu0
        %v2145 = vpop.f32.mrf.mxu0
        %v2146 = vadd.f32 %v2082, %v2145
        %v2147 = vpop.f32.mrf.mxu0
        %2148 = vdwg.mxu0
        %v2149 = vmax.f32 %v2135, 0.0
        %v2150 = vmax.f32 %v2138, 0.0
        %v2151 = vmax.f32 %v2143, 0.0
        %v2152 = vmax.f32 %v2146, 0.0
        %v2153 = vld [vmem:[%s7] sm:$0x1]
        %v2154 = vpack.c.bf16 %v2150, %v2149
        %v2155 = vpack.c.bf16 %v2152, %v2151
        %v2156 = vld [vmem:[#allocation2] sm:$0x1]
        %2158 = vset.pattern.permute.xlu0 0
        %2159 = vperm.xlu0 %2158, %v2156
        %v2160 = vpop.permute.xlu0 %2159
        %v2162 = vlaneseq
        %v2163 = vshrl.u32 %v2162, 7
        %v2164 = vsub.s32 0, %v2163
        %v2165 = vrot.slane %v2160, %v2164
        %v2167 = vsel %vm1478, %v2153, 0
        %2169 = vmatprep.subr.bf16.mxu0 0
        %2170 = vmatpush1.bf16.msra.mxu0 0
        %2171 = vmatprep.subr.bf16.mxu0 0
        %2172 = vmatpush1.bf16.msra.mxu0 0
        %2173 = vmatprep.subr.bf16.mxu0 0
        %2174 = vmatpush1.bf16.msra.mxu0 0
        %2175 = vmatprep.subr.bf16.mxu0 0
        %2176 = vmatpush1.bf16.msra.mxu0 0
        %2177 = vmatprep.subr.bf16.mxu0 0
        %2178 = vmatpush1.bf16.msra.mxu0 0
        %2179 = vmatprep.subr.bf16.mxu0 0
        %2180 = vmatpush1.bf16.msra.mxu0 0
        %2181 = vmatprep.subr.bf16.mxu0 0
        %2182 = vmatpush1.bf16.msra.mxu0 %v2155
        %2183 = vmatprep.subr.bf16.mxu0 0
        %2184 = vmatpush1.bf16.msra.mxu0 %v2154
        %2185 = vmatprep.subr.bf16.mxu0 0
        %2186 = vmatpush2.bf16.msra.mxu0 0
        %2187 = vmatprep.subr.bf16.mxu0 0
        %2188 = vmatpush2.bf16.msra.mxu0 0
        %2189 = vmatprep.subr.bf16.mxu0 0
        %2190 = vmatpush2.bf16.msra.mxu0 0
        %2191 = vmatprep.subr.bf16.mxu0 0
        %2192 = vmatpush2.bf16.msra.mxu0 0
        %2193 = vmatprep.subr.bf16.mxu0 0
        %2194 = vmatpush2.bf16.msra.mxu0 0
        %2195 = vmatprep.subr.bf16.mxu0 0
        %2196 = vmatpush2.bf16.msra.mxu0 0
        %2197 = vmatprep.subr.bf16.mxu0 0
        %2198 = vmatpush2.bf16.msra.mxu0 0
        %2199 = vmatprep.subr.bf16.mxu0 0
        %2200 = vmatpush2.bf16.msra.mxu0 0
        %2201 = vmatprep.mubr.bf16.mxu0 0
        %2202 = vmatmul.mubr.bf16.gmra.mxu0 %v2167
        %v2203 = vpop.f32.mrf.mxu0
        %v2204 = vadd.f32 %v2165, %v2203
        %v2205 = vpop.f32.mrf.mxu0
        %v2206 = vpop.f32.mrf.mxu0
        %v2207 = vpop.f32.mrf.mxu0
        %2208 = vdwg.mxu0
        %v2209 = vsub.f32 0.0, %v2204
        %v2210 = vmul.f32 %v2209, 1.442695
        %v2211 = vpow.pop %v2210
        %v2212 = vadd.f32 %v2211, 1.0
        %v2213 = vrcp.pop %v2212
        %v2214 = vmul.f32 1.0, %v2213
        %2215 = vst [vmem:[%s463] sm:$0x1] %v2214
        %s2216 = sand.u32 %s236, 1
        %s2217 = scalar_lea.sflag [#allocation6], %s2216
        %s2218 = sand.u32 %s236, 1
        %s2219 = scalar_lea.vmem [#allocation9], %s2218
        // Predicated region
        $region106: #{tpu_custom_call.1} parent=92 // pred_check
          %p2220 = pneg %p246
        $region107: #{tpu_custom_call.1} parent=92 // pred_check_branch
          %2222 = sbr.rel (%p2220) target = $region109
        $region108: #{tpu_custom_call.1} parent=92 // pred_region
          %s2224 = ssub.s32 16, 16
          %2225 = vsyncadd %s2217, %s2224
          %s2226 = smul.addr %s29, 16
          %s2227 = scalar_lea.hbm %s9, %s2226
          %s2229 = sshll.u32 %s2219, 4
          %s2230 = int_to_ptr.vmem [resolvable:$true] %s2229
          %2232 = dma.vmem_to_hbm [thread:$0]  %s2230, 16, %s2227, %s2217
        $region109: #{tpu_custom_call.1} parent=92 // pred_fallthru
          _
      $region93: #{tpu_custom_call.1} parent=5 // pred_fallthru
        _
      %p2233 = scmp.le.s32.totalorder 2, %s24
      // Predicated region
      $region110: #{tpu_custom_call.1} parent=5 // pred_check
        %p2234 = pneg %p2233
      $region111: #{tpu_custom_call.1} parent=5 // pred_check_branch
        %2236 = sbr.rel (%p2234) target = $region113
      $region112: #{tpu_custom_call.1} parent=5 // pred_region
        %s2237 = ssub.s32 %s24, 2
        // Predicated region
        $region114: #{tpu_custom_call.1} parent=112 // pred_check
          %p2238 = pneg %p252
        $region115: #{tpu_custom_call.1} parent=112 // pred_check_branch
          %2240 = sbr.rel (%p2238) target = $region117
        $region116: #{tpu_custom_call.1} parent=112 // pred_region
          %s2241 = sand.u32 %s237, 1
          %s2242 = scalar_lea.sflag [#allocation6], %s2241
          %s2243 = sand.u32 %s237, 1
          %s2244 = scalar_lea.vmem [#allocation9], %s2243
          %2245 = dma.done %s2242, 16
        $region117: #{tpu_custom_call.1} parent=112 // pred_fallthru
          _
      $region113: #{tpu_custom_call.1} parent=5 // pred_fallthru
        _
    $region6: #{tpu_custom_call.1} parent=1 // loop_footer
      %s28 = sadd.s32 1, %s24
    $region7: #{tpu_custom_call.1} parent=1 // loop_footer_branch
      %23 = sbr.rel target = $region3
    $region8: #{tpu_custom_call.1} parent=1 // loop_exit
      _
    %2246 = vsyncpa [#allocation5], 1
    %s2247 = scalar_lea.sflag [#allocation5], 1
    %2248 = vsyncpa %s2247, 1
    %2249 = vsyncpa [#allocation8], 1
    %2250 = vsyncpa [#allocation6], 1
    %s2251 = scalar_lea.sflag [#allocation6], 1
    %2252 = vsyncpa %s2251, 1

</llo_original>
